<compile_context>
chip_gen: v5e
topology: v5e:2x2
jax: 0.10.0
libtpu: 0.0.40
codegen_flags: <defaults>
</compile_context>

<pallas_src>
import functools

import jax
import jax.numpy as jnp
from jax.experimental import pallas as pl
from jax.experimental.pallas import tpu as pltpu


def _leaky_relu(x, slope):
    return jnp.where(x >= 0, x, slope * x)


def _round_up(n, m):
    return ((n + m - 1) // m) * m


def conditional_preactivation_kernel(
    *refs, negative_slope: float, layer_norm: bool, num_basis: int, do_pad: int,
):
    if layer_norm:
        (x_ref, c_ref, g_ref, be_ref, w0_ref, b0_ref, w1_ref, b1_ref,
         w2_ref, b2_ref, w2d_ref, bt_ref, out_ref) = refs
    else:
        (x_ref, c_ref, w0_ref, b0_ref, w1_ref, b1_ref,
         w2_ref, b2_ref, w2d_ref, bt_ref, out_ref) = refs
        g_ref = be_ref = None

    x = x_ref[...].astype(jnp.float32)

    # --- DenseActivation(x): optional LayerNorm, LeakyReLU, Dropout(eval) ---
    if layer_norm:
        mu = jnp.mean(x, axis=-1, keepdims=True)
        var = jnp.mean((x - mu) ** 2, axis=-1, keepdims=True)
        x = (x - mu) * jax.lax.rsqrt(var + 1e-5) * g_ref[...] + be_ref[...]
    # TODO(synk): dropout is eval-mode identity here (no training-mode RNG masking).
    x_act = _leaky_relu(x, negative_slope)

    # --- basis_functions(c): Linear -> resnet block (depth=1, ls=0.01) -> LeakyReLU -> Linear ---
    c = c_ref[...].astype(jnp.float32)
    h0 = jnp.dot(c, w0_ref[...], preferred_element_type=jnp.float32) + b0_ref[...]
    h1 = h0 + jnp.dot(_leaky_relu(h0, 0.01), w1_ref[...],
                      preferred_element_type=jnp.float32) + b1_ref[...]
    bf = jnp.dot(_leaky_relu(h1, 0.01), w2_ref[...],
                 preferred_element_type=jnp.float32) + b2_ref[...]

    # --- conditional linear, single lane-dense MXU matmul ---
    # P[:, k*do_pad:(k+1)*do_pad] == x_act @ weight_padded[k]
    p = jnp.dot(x_act, w2d_ref[...], preferred_element_type=jnp.float32)
    acc = jnp.dot(bf, bt_ref[...], preferred_element_type=jnp.float32)  # bf @ bias_pad
    for k in range(num_basis):  # small static unroll: 128-lane-aligned slices + scale
        acc = acc + bf[:, k:k + 1] * p[:, k * do_pad:(k + 1) * do_pad]
    out_ref[...] = acc.astype(out_ref.dtype)


def conditional_preactivation(x, c, params, *, negative_slope, layer_norm, tile_b=128):
    batch, dim_input = x.shape
    dim_condition = c.shape[1]
    dim_basis = params["w0"].shape[1]
    num_basis, _, dim_output = params["weight"].shape

    # ---- host-side layout plumbing (done once under jit by XLA) ----
    # Pad dim_output to a multiple of 128 so both the mixed-weight matmul and the
    # output store are lane-dense, then fold (nb, di, do_pad) -> (di, nb*do_pad).
    do_pad = _round_up(dim_output, 128)
    weight = params["weight"]
    bias = params["bias"]
    if do_pad != dim_output:
        weight = jnp.pad(weight, ((0, 0), (0, 0), (0, do_pad - dim_output)))
        bias = jnp.pad(bias, ((0, 0), (0, do_pad - dim_output)))
    w2d = jnp.transpose(weight, (1, 0, 2)).reshape(dim_input, num_basis * do_pad)

    # Pad batch to a multiple of the batch tile.
    tile_b = min(tile_b, _round_up(batch, 8))
    batch_p = _round_up(batch, tile_b)
    if batch_p != batch:
        x = jnp.pad(x, ((0, batch_p - batch), (0, 0)))
        c = jnp.pad(c, ((0, batch_p - batch), (0, 0)))
    grid = (batch_p // tile_b,)

    kernel = functools.partial(
        conditional_preactivation_kernel,
        negative_slope=negative_slope,
        layer_norm=layer_norm,
        num_basis=num_basis,
        do_pad=do_pad,
    )

    # Batch-tiled operands.
    x_spec = pl.BlockSpec((tile_b, dim_input), lambda i: (i, 0))
    c_spec = pl.BlockSpec((tile_b, dim_condition), lambda i: (i, 0))
    out_spec = pl.BlockSpec((tile_b, do_pad), lambda i: (i, 0))

    # Weights: constant index_map -> loaded once, VMEM-resident across grid steps.
    def const(shape):
        return pl.BlockSpec(shape, lambda i: tuple(0 for _ in shape))

    args = [x, c]
    in_specs = [x_spec, c_spec]
    if layer_norm:
        args += [params["ln_gamma"], params["ln_beta"]]
        in_specs += [const((1, dim_input)), const((1, dim_input))]
    args += [params["w0"], params["b0"], params["w1"], params["b1"],
             params["w2"], params["b2"], w2d, bias]
    in_specs += [const((dim_condition, dim_basis)), const((1, dim_basis)),
                 const((dim_basis, dim_basis)), const((1, dim_basis)),
                 const((dim_basis, num_basis)), const((1, num_basis)),
                 const((dim_input, num_basis * do_pad)),
                 const((num_basis, do_pad))]

    # VMEM budget: resident weights + double-buffered batch tiles (+ slack for the
    # in-kernel (tile_b, nb*do_pad) intermediate). Capped at 64 MiB so it fits v7x.
    f32 = 4
    resident = f32 * (dim_condition * dim_basis + dim_basis
                      + dim_basis * dim_basis + dim_basis
                      + dim_basis * num_basis + num_basis
                      + dim_input * num_basis * do_pad + num_basis * do_pad
                      + (2 * dim_input if layer_norm else 0))
    tiles = 2 * f32 * tile_b * (dim_input + dim_condition + do_pad + num_basis * do_pad)
    vmem_limit = int(min(max(2 * (resident + tiles), 32 * 1024 * 1024), 64 * 1024 * 1024))
    # TODO(synk): if nb*di*do_pad*4B grows past ~30 MiB, add a dim_output grid axis
    # instead of keeping the whole mixed-weight slab resident (v7x has 64 MiB VMEM).

    out = pl.pallas_call(
        kernel,
        out_shape=jax.ShapeDtypeStruct((batch_p, do_pad), jnp.float32),
        grid=grid,
        in_specs=in_specs,
        out_specs=out_spec,
        compiler_params=pltpu.CompilerParams(
            dimension_semantics=("parallel",),
            vmem_limit_bytes=vmem_limit,
        ),
    )(*args)
    return out[:batch, :dim_output]


def make_params(key, *, dim_input, dim_condition, dim_output, num_basis, dim_basis):
    """Deterministic synthetic parameters with the shapes of ConditionalPreactivation."""
    ks = jax.random.split(key, 8)

    def uni(k, shape, bound):
        return jax.random.uniform(k, shape, jnp.float32, -bound, bound)

    b_lin0 = 1.0 / jnp.sqrt(dim_condition)
    b_lin1 = 1.0 / jnp.sqrt(dim_basis)
    b_cond = 1.0 / jnp.sqrt(dim_input)
    return {
        # LayerNorm affine (PyTorch default init: gamma=1, beta=0)
        "ln_gamma": jnp.ones((1, dim_input), jnp.float32),
        "ln_beta": jnp.zeros((1, dim_input), jnp.float32),
        # basis_functions: Linear(dc->bf), resnet Linear(bf->bf), Linear(bf->nb)
        "w0": uni(ks[0], (dim_condition, dim_basis), b_lin0),
        "b0": uni(ks[1], (1, dim_basis), b_lin0),
        "w1": uni(ks[2], (dim_basis, dim_basis), b_lin1),
        "b1": uni(ks[3], (1, dim_basis), b_lin1),
        "w2": uni(ks[4], (dim_basis, num_basis), b_lin1),
        "b2": uni(ks[5], (1, num_basis), b_lin1),
        # ConditionalLinear parameters: uniform(-1/sqrt(dim_input), 1/sqrt(dim_input))
        "weight": uni(ks[6], (num_basis, dim_input, dim_output), b_cond),
        "bias": uni(ks[7], (num_basis, dim_output), b_cond),
    }


def reference(x, c, params, *, negative_slope, layer_norm):
    """Pure-JAX replica of the exact PyTorch op order (for correctness check)."""
    if layer_norm:
        mu = x.mean(-1, keepdims=True)
        var = ((x - mu) ** 2).mean(-1, keepdims=True)
        x = (x - mu) / jnp.sqrt(var + 1e-5) * params["ln_gamma"] + params["ln_beta"]
    xa = _leaky_relu(x, negative_slope)
    h0 = c @ params["w0"] + params["b0"]
    h1 = h0 + _leaky_relu(h0, 0.01) @ params["w1"] + params["b1"]
    bf = _leaky_relu(h1, 0.01) @ params["w2"] + params["b2"]
    nb, di, do = params["weight"].shape
    w = (bf @ params["weight"].reshape(nb, di * do)).reshape(-1, di, do)
    out = jnp.einsum("bi,bio->bo", xa, w)
    return out + bf @ params["bias"]


if __name__ == "__main__":
    # Small shapes consistent with the module's forward; batch chosen so the grid
    # has >1 step and a non-multiple size to exercise padding.
    batch, dim_input, dim_condition, dim_output = 200, 32, 16, 24
    num_basis, dim_basis = 8, 32
    negative_slope = 0.2
    # NOTE: spectral_norm=0.0 path (plain ConditionalLinear); spectral_norm_fc not applied.

    key = jax.random.PRNGKey(0)
    kx, kc, kp = jax.random.split(key, 3)
    x = jax.random.normal(kx, (batch, dim_input), jnp.float32)
    c = jax.random.normal(kc, (batch, dim_condition), jnp.float32)
    params = make_params(kp, dim_input=dim_input, dim_condition=dim_condition,
                         dim_output=dim_output, num_basis=num_basis, dim_basis=dim_basis)

    for layer_norm in (True, False):
        out = conditional_preactivation(
            x, c, params, negative_slope=negative_slope, layer_norm=layer_norm, tile_b=128)
        out = jax.block_until_ready(out)
        ref = reference(x, c, params, negative_slope=negative_slope, layer_norm=layer_norm)
        assert out.shape == (batch, dim_output)
        assert jnp.allclose(out, ref, atol=1e-4, rtol=1e-4), float(jnp.abs(out - ref).max())

    print("KERNEL_OK")
</pallas_src>

<mosaic_0001>
module attributes {stable_mosaic.version = 11 : i64} {
  func.func @conditional_preactivation_kernel(%arg0: i32, %arg1: memref<128x32xf32, #tpu.memory_space<vmem>>, %arg2: memref<128x16xf32, #tpu.memory_space<vmem>>, %arg3: memref<1x32xf32, #tpu.memory_space<vmem>>, %arg4: memref<1x32xf32, #tpu.memory_space<vmem>>, %arg5: memref<16x32xf32, #tpu.memory_space<vmem>>, %arg6: memref<1x32xf32, #tpu.memory_space<vmem>>, %arg7: memref<32x32xf32, #tpu.memory_space<vmem>>, %arg8: memref<1x32xf32, #tpu.memory_space<vmem>>, %arg9: memref<32x8xf32, #tpu.memory_space<vmem>>, %arg10: memref<1x8xf32, #tpu.memory_space<vmem>>, %arg11: memref<32x1024xf32, #tpu.memory_space<vmem>>, %arg12: memref<8x128xf32, #tpu.memory_space<vmem>>, %arg13: memref<128x128xf32, #tpu.memory_space<vmem>>) attributes {dimension_semantics = [#tpu.dimension_semantics<parallel>], iteration_bounds = array<i64: 2>, scalar_prefetch = 0 : i64, scratch_operands = 0 : i64, tpu.core_type = #tpu.core_type<tc>, window_params = [{transform_indices = @transform_0, window_bounds = array<i64: 128, 32>}, {transform_indices = @transform_1, window_bounds = array<i64: 128, 16>}, {pipeline_mode = #tpu.pipeline_mode<synchronous>, transform_indices = @transform_2, window_bounds = array<i64: 1, 32>}, {pipeline_mode = #tpu.pipeline_mode<synchronous>, transform_indices = @transform_3, window_bounds = array<i64: 1, 32>}, {pipeline_mode = #tpu.pipeline_mode<synchronous>, transform_indices = @transform_4, window_bounds = array<i64: 16, 32>}, {pipeline_mode = #tpu.pipeline_mode<synchronous>, transform_indices = @transform_5, window_bounds = array<i64: 1, 32>}, {pipeline_mode = #tpu.pipeline_mode<synchronous>, transform_indices = @transform_6, window_bounds = array<i64: 32, 32>}, {pipeline_mode = #tpu.pipeline_mode<synchronous>, transform_indices = @transform_7, window_bounds = array<i64: 1, 32>}, {pipeline_mode = #tpu.pipeline_mode<synchronous>, transform_indices = @transform_8, window_bounds = array<i64: 32, 8>}, {pipeline_mode = #tpu.pipeline_mode<synchronous>, transform_indices = @transform_9, window_bounds = array<i64: 1, 8>}, {pipeline_mode = #tpu.pipeline_mode<synchronous>, transform_indices = @transform_10, window_bounds = array<i64: 32, 1024>}, {pipeline_mode = #tpu.pipeline_mode<synchronous>, transform_indices = @transform_11, window_bounds = array<i64: 8, 128>}, {transform_indices = @transform_12, window_bounds = array<i64: 128, 128>}]} {
    %c0 = arith.constant 0 : index
    %c0_0 = arith.constant 0 : index
    %0 = vector.load %arg1[%c0, %c0_0] : memref<128x32xf32, #tpu.memory_space<vmem>>, vector<128x32xf32>
    %cst = arith.constant dense<0.000000e+00> : vector<128xf32>
    %1 = vector.multi_reduction <add>, %0, %cst [1] : vector<128x32xf32> to vector<128xf32>
    %2 = vector.shape_cast %1 : vector<128xf32> to vector<128x1xf32>
    %cst_1 = arith.constant 3.200000e+01 : f32
    %3 = vector.broadcast %cst_1 : f32 to vector<128x1xf32>
    %4 = arith.divf %2, %3 : vector<128x1xf32>
    %5 = vector.broadcast %4 : vector<128x1xf32> to vector<128x32xf32>
    %6 = arith.subf %0, %5 : vector<128x32xf32>
    %7 = arith.mulf %6, %6 : vector<128x32xf32>
    %cst_2 = arith.constant dense<0.000000e+00> : vector<128xf32>
    %8 = vector.multi_reduction <add>, %7, %cst_2 [1] : vector<128x32xf32> to vector<128xf32>
    %9 = vector.shape_cast %8 : vector<128xf32> to vector<128x1xf32>
    %cst_3 = arith.constant 3.200000e+01 : f32
    %10 = vector.broadcast %cst_3 : f32 to vector<128x1xf32>
    %11 = arith.divf %9, %10 : vector<128x1xf32>
    %12 = vector.broadcast %4 : vector<128x1xf32> to vector<128x32xf32>
    %13 = arith.subf %0, %12 : vector<128x32xf32>
    %cst_4 = arith.constant 9.99999974E-6 : f32
    %14 = vector.broadcast %cst_4 : f32 to vector<128x1xf32>
    %15 = arith.addf %11, %14 : vector<128x1xf32>
    %16 = math.rsqrt %15 : vector<128x1xf32>
    %17 = vector.broadcast %16 : vector<128x1xf32> to vector<128x32xf32>
    %18 = arith.mulf %13, %17 : vector<128x32xf32>
    %c0_5 = arith.constant 0 : index
    %c0_6 = arith.constant 0 : index
    %19 = vector.load %arg3[%c0_5, %c0_6] : memref<1x32xf32, #tpu.memory_space<vmem>>, vector<1x32xf32>
    %20 = vector.broadcast %19 : vector<1x32xf32> to vector<128x32xf32>
    %21 = arith.mulf %18, %20 : vector<128x32xf32>
    %c0_7 = arith.constant 0 : index
    %c0_8 = arith.constant 0 : index
    %22 = vector.load %arg4[%c0_7, %c0_8] : memref<1x32xf32, #tpu.memory_space<vmem>>, vector<1x32xf32>
    %23 = vector.broadcast %22 : vector<1x32xf32> to vector<128x32xf32>
    %24 = arith.addf %21, %23 : vector<128x32xf32>
    %cst_9 = arith.constant 0.000000e+00 : f32
    %25 = vector.broadcast %cst_9 : f32 to vector<128x32xf32>
    %26 = arith.cmpf oge, %24, %25 : vector<128x32xf32>
    %cst_10 = arith.constant 2.000000e-01 : f32
    %27 = vector.broadcast %cst_10 : f32 to vector<128x32xf32>
    %28 = arith.mulf %27, %24 : vector<128x32xf32>
    %29 = arith.select %26, %24, %28 : vector<128x32xi1>, vector<128x32xf32>
    %c0_11 = arith.constant 0 : index
    %c0_12 = arith.constant 0 : index
    %30 = vector.load %arg2[%c0_11, %c0_12] : memref<128x16xf32, #tpu.memory_space<vmem>>, vector<128x16xf32>
    %c0_13 = arith.constant 0 : index
    %c0_14 = arith.constant 0 : index
    %31 = vector.load %arg5[%c0_13, %c0_14] : memref<16x32xf32, #tpu.memory_space<vmem>>, vector<16x32xf32>
    %cst_15 = arith.constant dense<0.000000e+00> : vector<128x32xf32>
    %32 = tpu.matmul %30, %31, %cst_15 {dimension_numbers = #tpu.dot_dimension_numbers<[1], [0], [0], [1], [0, 0, 1, 1], [], []>} : vector<128x16xf32>, vector<16x32xf32>, vector<128x32xf32> -> vector<128x32xf32>
    %c0_16 = arith.constant 0 : index
    %c0_17 = arith.constant 0 : index
    %33 = vector.load %arg6[%c0_16, %c0_17] : memref<1x32xf32, #tpu.memory_space<vmem>>, vector<1x32xf32>
    %34 = vector.broadcast %33 : vector<1x32xf32> to vector<128x32xf32>
    %35 = arith.addf %32, %34 : vector<128x32xf32>
    %cst_18 = arith.constant 0.000000e+00 : f32
    %36 = vector.broadcast %cst_18 : f32 to vector<128x32xf32>
    %37 = arith.cmpf oge, %35, %36 : vector<128x32xf32>
    %cst_19 = arith.constant 0.00999999977 : f32
    %38 = vector.broadcast %cst_19 : f32 to vector<128x32xf32>
    %39 = arith.mulf %38, %35 : vector<128x32xf32>
    %40 = arith.select %37, %35, %39 : vector<128x32xi1>, vector<128x32xf32>
    %c0_20 = arith.constant 0 : index
    %c0_21 = arith.constant 0 : index
    %41 = vector.load %arg7[%c0_20, %c0_21] : memref<32x32xf32, #tpu.memory_space<vmem>>, vector<32x32xf32>
    %cst_22 = arith.constant dense<0.000000e+00> : vector<128x32xf32>
    %42 = tpu.matmul %40, %41, %cst_22 {dimension_numbers = #tpu.dot_dimension_numbers<[1], [0], [0], [1], [0, 0, 1, 1], [], []>} : vector<128x32xf32>, vector<32x32xf32>, vector<128x32xf32> -> vector<128x32xf32>
    %43 = arith.addf %35, %42 : vector<128x32xf32>
    %c0_23 = arith.constant 0 : index
    %c0_24 = arith.constant 0 : index
    %44 = vector.load %arg8[%c0_23, %c0_24] : memref<1x32xf32, #tpu.memory_space<vmem>>, vector<1x32xf32>
    %45 = vector.broadcast %44 : vector<1x32xf32> to vector<128x32xf32>
    %46 = arith.addf %43, %45 : vector<128x32xf32>
    %cst_25 = arith.constant 0.000000e+00 : f32
    %47 = vector.broadcast %cst_25 : f32 to vector<128x32xf32>
    %48 = arith.cmpf oge, %46, %47 : vector<128x32xf32>
    %cst_26 = arith.constant 0.00999999977 : f32
    %49 = vector.broadcast %cst_26 : f32 to vector<128x32xf32>
    %50 = arith.mulf %49, %46 : vector<128x32xf32>
    %51 = arith.select %48, %46, %50 : vector<128x32xi1>, vector<128x32xf32>
    %c0_27 = arith.constant 0 : index
    %c0_28 = arith.constant 0 : index
    %52 = vector.load %arg9[%c0_27, %c0_28] : memref<32x8xf32, #tpu.memory_space<vmem>>, vector<32x8xf32>
    %cst_29 = arith.constant dense<0.000000e+00> : vector<128x8xf32>
    %53 = tpu.matmul %51, %52, %cst_29 {dimension_numbers = #tpu.dot_dimension_numbers<[1], [0], [0], [1], [0, 0, 1, 1], [], []>} : vector<128x32xf32>, vector<32x8xf32>, vector<128x8xf32> -> vector<128x8xf32>
    %c0_30 = arith.constant 0 : index
    %c0_31 = arith.constant 0 : index
    %54 = vector.load %arg10[%c0_30, %c0_31] : memref<1x8xf32, #tpu.memory_space<vmem>>, vector<1x8xf32>
    %55 = vector.broadcast %54 : vector<1x8xf32> to vector<128x8xf32>
    %56 = arith.addf %53, %55 : vector<128x8xf32>
    %c0_32 = arith.constant 0 : index
    %c0_33 = arith.constant 0 : index
    %57 = vector.load %arg11[%c0_32, %c0_33] : memref<32x1024xf32, #tpu.memory_space<vmem>>, vector<32x1024xf32>
    %cst_34 = arith.constant dense<0.000000e+00> : vector<128x1024xf32>
    %58 = tpu.matmul %29, %57, %cst_34 {dimension_numbers = #tpu.dot_dimension_numbers<[1], [0], [0], [1], [0, 0, 1, 1], [], []>} : vector<128x32xf32>, vector<32x1024xf32>, vector<128x1024xf32> -> vector<128x1024xf32>
    %c0_35 = arith.constant 0 : index
    %c0_36 = arith.constant 0 : index
    %59 = vector.load %arg12[%c0_35, %c0_36] : memref<8x128xf32, #tpu.memory_space<vmem>>, vector<8x128xf32>
    %cst_37 = arith.constant dense<0.000000e+00> : vector<128x128xf32>
    %60 = tpu.matmul %56, %59, %cst_37 {dimension_numbers = #tpu.dot_dimension_numbers<[1], [0], [0], [1], [0, 0, 1, 1], [], []>} : vector<128x8xf32>, vector<8x128xf32>, vector<128x128xf32> -> vector<128x128xf32>
    %61 = vector.extract_strided_slice %56 {offsets = [0, 0], sizes = [128, 1], strides = [1, 1]} : vector<128x8xf32> to vector<128x1xf32>
    %62 = vector.extract_strided_slice %58 {offsets = [0, 0], sizes = [128, 128], strides = [1, 1]} : vector<128x1024xf32> to vector<128x128xf32>
    %63 = vector.broadcast %61 : vector<128x1xf32> to vector<128x128xf32>
    %64 = arith.mulf %63, %62 : vector<128x128xf32>
    %65 = arith.addf %60, %64 : vector<128x128xf32>
    %66 = vector.extract_strided_slice %56 {offsets = [0, 1], sizes = [128, 1], strides = [1, 1]} : vector<128x8xf32> to vector<128x1xf32>
    %67 = vector.extract_strided_slice %58 {offsets = [0, 128], sizes = [128, 128], strides = [1, 1]} : vector<128x1024xf32> to vector<128x128xf32>
    %68 = vector.broadcast %66 : vector<128x1xf32> to vector<128x128xf32>
    %69 = arith.mulf %68, %67 : vector<128x128xf32>
    %70 = arith.addf %65, %69 : vector<128x128xf32>
    %71 = vector.extract_strided_slice %56 {offsets = [0, 2], sizes = [128, 1], strides = [1, 1]} : vector<128x8xf32> to vector<128x1xf32>
    %72 = vector.extract_strided_slice %58 {offsets = [0, 256], sizes = [128, 128], strides = [1, 1]} : vector<128x1024xf32> to vector<128x128xf32>
    %73 = vector.broadcast %71 : vector<128x1xf32> to vector<128x128xf32>
    %74 = arith.mulf %73, %72 : vector<128x128xf32>
    %75 = arith.addf %70, %74 : vector<128x128xf32>
    %76 = vector.extract_strided_slice %56 {offsets = [0, 3], sizes = [128, 1], strides = [1, 1]} : vector<128x8xf32> to vector<128x1xf32>
    %77 = vector.extract_strided_slice %58 {offsets = [0, 384], sizes = [128, 128], strides = [1, 1]} : vector<128x1024xf32> to vector<128x128xf32>
    %78 = vector.broadcast %76 : vector<128x1xf32> to vector<128x128xf32>
    %79 = arith.mulf %78, %77 : vector<128x128xf32>
    %80 = arith.addf %75, %79 : vector<128x128xf32>
    %81 = vector.extract_strided_slice %56 {offsets = [0, 4], sizes = [128, 1], strides = [1, 1]} : vector<128x8xf32> to vector<128x1xf32>
    %82 = vector.extract_strided_slice %58 {offsets = [0, 512], sizes = [128, 128], strides = [1, 1]} : vector<128x1024xf32> to vector<128x128xf32>
    %83 = vector.broadcast %81 : vector<128x1xf32> to vector<128x128xf32>
    %84 = arith.mulf %83, %82 : vector<128x128xf32>
    %85 = arith.addf %80, %84 : vector<128x128xf32>
    %86 = vector.extract_strided_slice %56 {offsets = [0, 5], sizes = [128, 1], strides = [1, 1]} : vector<128x8xf32> to vector<128x1xf32>
    %87 = vector.extract_strided_slice %58 {offsets = [0, 640], sizes = [128, 128], strides = [1, 1]} : vector<128x1024xf32> to vector<128x128xf32>
    %88 = vector.broadcast %86 : vector<128x1xf32> to vector<128x128xf32>
    %89 = arith.mulf %88, %87 : vector<128x128xf32>
    %90 = arith.addf %85, %89 : vector<128x128xf32>
    %91 = vector.extract_strided_slice %56 {offsets = [0, 6], sizes = [128, 1], strides = [1, 1]} : vector<128x8xf32> to vector<128x1xf32>
    %92 = vector.extract_strided_slice %58 {offsets = [0, 768], sizes = [128, 128], strides = [1, 1]} : vector<128x1024xf32> to vector<128x128xf32>
    %93 = vector.broadcast %91 : vector<128x1xf32> to vector<128x128xf32>
    %94 = arith.mulf %93, %92 : vector<128x128xf32>
    %95 = arith.addf %90, %94 : vector<128x128xf32>
    %96 = vector.extract_strided_slice %56 {offsets = [0, 7], sizes = [128, 1], strides = [1, 1]} : vector<128x8xf32> to vector<128x1xf32>
    %97 = vector.extract_strided_slice %58 {offsets = [0, 896], sizes = [128, 128], strides = [1, 1]} : vector<128x1024xf32> to vector<128x128xf32>
    %98 = vector.broadcast %96 : vector<128x1xf32> to vector<128x128xf32>
    %99 = arith.mulf %98, %97 : vector<128x128xf32>
    %100 = arith.addf %95, %99 : vector<128x128xf32>
    %c0_38 = arith.constant 0 : index
    %c0_39 = arith.constant 0 : index
    %101 = vector.load %arg13[%c0_38, %c0_39] : memref<128x128xf32, #tpu.memory_space<vmem>>, vector<128x128xf32>
    tpu.vector_store %arg13[%c0_38, %c0_39], %100 {strides = array<i32>} : memref<128x128xf32, #tpu.memory_space<vmem>>, vector<128x128xf32>,
    return
  }
  func.func @transform_0(%arg0: i32) -> (i32, i32) {
    %c0_i32 = arith.constant 0 : i32
    %c0_i32_0 = arith.constant 0 : i32
    return %arg0, %c0_i32 : i32, i32
  }
  func.func @transform_1(%arg0: i32) -> (i32, i32) {
    %c0_i32 = arith.constant 0 : i32
    %c0_i32_0 = arith.constant 0 : i32
    return %arg0, %c0_i32 : i32, i32
  }
  func.func @transform_2(%arg0: i32) -> (i32, i32) {
    %c0_i32 = arith.constant 0 : i32
    %c0_i32_0 = arith.constant 0 : i32
    %c0_i32_1 = arith.constant 0 : i32
    return %c0_i32, %c0_i32_0 : i32, i32
  }
  func.func @transform_3(%arg0: i32) -> (i32, i32) {
    %c0_i32 = arith.constant 0 : i32
    %c0_i32_0 = arith.constant 0 : i32
    %c0_i32_1 = arith.constant 0 : i32
    return %c0_i32, %c0_i32_0 : i32, i32
  }
  func.func @transform_4(%arg0: i32) -> (i32, i32) {
    %c0_i32 = arith.constant 0 : i32
    %c0_i32_0 = arith.constant 0 : i32
    %c0_i32_1 = arith.constant 0 : i32
    return %c0_i32, %c0_i32_0 : i32, i32
  }
  func.func @transform_5(%arg0: i32) -> (i32, i32) {
    %c0_i32 = arith.constant 0 : i32
    %c0_i32_0 = arith.constant 0 : i32
    %c0_i32_1 = arith.constant 0 : i32
    return %c0_i32, %c0_i32_0 : i32, i32
  }
  func.func @transform_6(%arg0: i32) -> (i32, i32) {
    %c0_i32 = arith.constant 0 : i32
    %c0_i32_0 = arith.constant 0 : i32
    %c0_i32_1 = arith.constant 0 : i32
    return %c0_i32, %c0_i32_0 : i32, i32
  }
  func.func @transform_7(%arg0: i32) -> (i32, i32) {
    %c0_i32 = arith.constant 0 : i32
    %c0_i32_0 = arith.constant 0 : i32
    %c0_i32_1 = arith.constant 0 : i32
    return %c0_i32, %c0_i32_0 : i32, i32
  }
  func.func @transform_8(%arg0: i32) -> (i32, i32) {
    %c0_i32 = arith.constant 0 : i32
    %c0_i32_0 = arith.constant 0 : i32
    %c0_i32_1 = arith.constant 0 : i32
    return %c0_i32, %c0_i32_0 : i32, i32
  }
  func.func @transform_9(%arg0: i32) -> (i32, i32) {
    %c0_i32 = arith.constant 0 : i32
    %c0_i32_0 = arith.constant 0 : i32
    %c0_i32_1 = arith.constant 0 : i32
    return %c0_i32, %c0_i32_0 : i32, i32
  }
  func.func @transform_10(%arg0: i32) -> (i32, i32) {
    %c0_i32 = arith.constant 0 : i32
    %c0_i32_0 = arith.constant 0 : i32
    %c0_i32_1 = arith.constant 0 : i32
    return %c0_i32, %c0_i32_0 : i32, i32
  }
  func.func @transform_11(%arg0: i32) -> (i32, i32) {
    %c0_i32 = arith.constant 0 : i32
    %c0_i32_0 = arith.constant 0 : i32
    %c0_i32_1 = arith.constant 0 : i32
    return %c0_i32, %c0_i32_0 : i32, i32
  }
  func.func @transform_12(%arg0: i32) -> (i32, i32) {
    %c0_i32 = arith.constant 0 : i32
    %c0_i32_0 = arith.constant 0 : i32
    return %arg0, %c0_i32 : i32, i32
  }
}

</mosaic_0001>

<llo_original>
// kernel: tpu_custom_call.1
$region0: #{tpu_custom_call.1}
  #allocation0 [shape = 'u32[]', space=smem, size = 0x4, offset = 0x4, fixed_abs, tag = 'smem constant byte address 0x4 - core index']
  #allocation1 [shape = 'u32[72,128]{1,0:T(1,128)}', space=vmem, size = 0x9000, scoped, tag = 'internal scratch']
  %s0 = inlined_call_operand.vmem [shape: f32[256,32], index: 0, kind: input, shape index: {}]
  %s1 = inlined_call_operand.vmem [shape: f32[256,16], index: 1, kind: input, shape index: {}]
  %s2 = inlined_call_operand.vmem [shape: f32[1,32], index: 2, kind: input, shape index: {}]
  %s3 = inlined_call_operand.vmem [shape: f32[1,32], index: 3, kind: input, shape index: {}]
  %s4 = inlined_call_operand.vmem [shape: f32[16,32], index: 4, kind: input, shape index: {}]
  %s5 = inlined_call_operand.vmem [shape: f32[1,32], index: 5, kind: input, shape index: {}]
  %s6 = inlined_call_operand.vmem [shape: f32[32,32], index: 6, kind: input, shape index: {}]
  %s7 = inlined_call_operand.vmem [shape: f32[1,32], index: 7, kind: input, shape index: {}]
  %s8 = inlined_call_operand.vmem [shape: f32[32,8], index: 8, kind: input, shape index: {}]
  %s9 = inlined_call_operand.vmem [shape: f32[1,8], index: 9, kind: input, shape index: {}]
  %s10 = inlined_call_operand.vmem [shape: f32[32,1024], index: 10, kind: input, shape index: {}]
  %s11 = inlined_call_operand.vmem [shape: f32[8,128], index: 11, kind: input, shape index: {}]
  %s12 = inlined_call_operand.hbm [shape: f32[256,128], index: 12, kind: output, shape index: {}]
  %s13 = sld [smem:[#allocation0]]
  $region81: #{tpu_custom_call.1} parent=0
    _
  %s15 = ssub.s32 1, %s13
  %s16 = scalar_select 0, %s15, %s13
  $region1: #{tpu_custom_call.1} parent=0
    #allocation2 [shape = 'u8[131072]{0}', space=vmem, size = 0x20000, scoped, tag = 'output window, operand 0']
    #allocation3 [shape = 's32[2]{0}', space=sflag, size = 0x8, scoped, tag = 'scoped memory for tpu_custom_call.1']
    %17 = vsyncpa [#allocation3], 0
    %s18 = scalar_lea.sflag [#allocation3], 1
    %19 = vsyncpa %s18, 0
    loop: start=0, step=1, limit=4
    $region2: #{tpu_custom_call.1} parent=1 // loop_pre_header
      _
    $region3: #{tpu_custom_call.1} parent=1 // loop_header
      %s21 = sphi 0, %s25
      %p22 = scmp.ge.s32.totalorder %s21, 4
      %s31 = sphi 0, %s33
      %s34 = sphi 0, %s31
      %s35 = sphi 0, %s34
      %s51 = sphi 0, %s35
      %s57 = sphi 0, %s59
      %s60 = sphi 0, %s57
      %s61 = sphi 0, %s60
      %s77 = sphi 0, %s61
      %s81 = sphi 0, %s81
      %s83 = sphi 0, %s81
      %s84 = sphi 0, %s83
      %s98 = sphi 0, %s84
      %s102 = sphi 0, %s102
      %s104 = sphi 0, %s102
      %s105 = sphi 0, %s104
      %s119 = sphi 0, %s105
      %s123 = sphi 0, %s123
      %s125 = sphi 0, %s123
      %s126 = sphi 0, %s125
      %s140 = sphi 0, %s126
      %s144 = sphi 0, %s144
      %s146 = sphi 0, %s144
      %s147 = sphi 0, %s146
      %s161 = sphi 0, %s147
      %s165 = sphi 0, %s165
      %s167 = sphi 0, %s165
      %s168 = sphi 0, %s167
      %s182 = sphi 0, %s168
      %s186 = sphi 0, %s186
      %s188 = sphi 0, %s186
      %s189 = sphi 0, %s188
      %s203 = sphi 0, %s189
      %s207 = sphi 0, %s207
      %s209 = sphi 0, %s207
      %s210 = sphi 0, %s209
      %s224 = sphi 0, %s210
      %s228 = sphi 0, %s228
      %s230 = sphi 0, %s228
      %s231 = sphi 0, %s230
      %s245 = sphi 0, %s231
      %s249 = sphi 0, %s249
      %s251 = sphi 0, %s249
      %s252 = sphi 0, %s251
      %s266 = sphi 0, %s252
      %s270 = sphi 0, %s270
      %s272 = sphi 0, %s270
      %s273 = sphi 0, %s272
      %s287 = sphi 0, %s273
      %s293 = sphi 0, %s295
      %s296 = sphi 0, %s293
      %s297 = sphi 0, %s296
      %s313 = sphi 0, %s297
    $region4: #{tpu_custom_call.1} parent=1 // loop_header_branch
      %24 = sbr.rel (%p22) target = $region8
    $region5: #{tpu_custom_call.1} parent=1 // loop_body
      %s26 = ssub.s32 %s21, 1
      %s27 = ssub.s32 %s21, 2
      %s28 = sadd.s32 %s21, 1
      %s29 = ssub.s32 %s21, %s28
      %p30 = scmp.eq.s32.totalorder %s29, 0
      %s32 = sadd.s32 %s31, 1
      %s33 = scalar_select %p30, %s31, %s32
      %p36 = pneg %p30
      %p37 = scmp.eq.s32.totalorder %s21, 1
      %p38 = por %p36, %p37
      %p39 = scmp.ne.s32.totalorder %s31, %s34
      %p40 = scmp.eq.s32.totalorder %s21, 0
      %p41 = por %p39, %p40
      %p42 = scmp.ne.s32.totalorder %s31, %s34
      %p43 = scmp.eq.s32.totalorder %s26, 1
      %p44 = por %p42, %p43
      %p45 = scmp.ne.s32.totalorder %s34, %s35
      %p46 = scmp.eq.s32.totalorder %s26, 0
      %p47 = por %p45, %p46
      %p48 = scmp.ne.s32.totalorder %s34, %s35
      %p49 = scmp.eq.s32.totalorder %s27, 1
      %p50 = por %p48, %p49
      %p52 = scmp.ne.s32.totalorder %s35, %s51
      %p53 = scmp.eq.s32.totalorder %s27, 0
      %p54 = por %p52, %p53
      %s55 = ssub.s32 %s21, %s28
      %p56 = scmp.eq.s32.totalorder %s55, 0
      %s58 = sadd.s32 %s57, 1
      %s59 = scalar_select %p56, %s57, %s58
      %p62 = pneg %p56
      %p63 = scmp.eq.s32.totalorder %s21, 1
      %p64 = por %p62, %p63
      %p65 = scmp.ne.s32.totalorder %s57, %s60
      %p66 = scmp.eq.s32.totalorder %s21, 0
      %p67 = por %p65, %p66
      %p68 = scmp.ne.s32.totalorder %s57, %s60
      %p69 = scmp.eq.s32.totalorder %s26, 1
      %p70 = por %p68, %p69
      %p71 = scmp.ne.s32.totalorder %s60, %s61
      %p72 = scmp.eq.s32.totalorder %s26, 0
      %p73 = por %p71, %p72
      %p74 = scmp.ne.s32.totalorder %s60, %s61
      %p75 = scmp.eq.s32.totalorder %s27, 1
      %p76 = por %p74, %p75
      %p78 = scmp.ne.s32.totalorder %s61, %s77
      %p79 = scmp.eq.s32.totalorder %s27, 0
      %p80 = por %p78, %p79
      %s82 = sadd.s32 %s81, 1
      %p85 = scmp.eq.s32.totalorder %s21, 1
      %p86 = scmp.ne.s32.totalorder %s81, %s83
      %p87 = scmp.eq.s32.totalorder %s21, 0
      %p88 = por %p86, %p87
      %p89 = scmp.ne.s32.totalorder %s81, %s83
      %p90 = scmp.eq.s32.totalorder %s26, 1
      %p91 = por %p89, %p90
      %p92 = scmp.ne.s32.totalorder %s83, %s84
      %p93 = scmp.eq.s32.totalorder %s26, 0
      %p94 = por %p92, %p93
      %p95 = scmp.ne.s32.totalorder %s83, %s84
      %p96 = scmp.eq.s32.totalorder %s27, 1
      %p97 = por %p95, %p96
      %p99 = scmp.ne.s32.totalorder %s84, %s98
      %p100 = scmp.eq.s32.totalorder %s27, 0
      %p101 = por %p99, %p100
      %s103 = sadd.s32 %s102, 1
      %p106 = scmp.eq.s32.totalorder %s21, 1
      %p107 = scmp.ne.s32.totalorder %s102, %s104
      %p108 = scmp.eq.s32.totalorder %s21, 0
      %p109 = por %p107, %p108
      %p110 = scmp.ne.s32.totalorder %s102, %s104
      %p111 = scmp.eq.s32.totalorder %s26, 1
      %p112 = por %p110, %p111
      %p113 = scmp.ne.s32.totalorder %s104, %s105
      %p114 = scmp.eq.s32.totalorder %s26, 0
      %p115 = por %p113, %p114
      %p116 = scmp.ne.s32.totalorder %s104, %s105
      %p117 = scmp.eq.s32.totalorder %s27, 1
      %p118 = por %p116, %p117
      %p120 = scmp.ne.s32.totalorder %s105, %s119
      %p121 = scmp.eq.s32.totalorder %s27, 0
      %p122 = por %p120, %p121
      %s124 = sadd.s32 %s123, 1
      %p127 = scmp.eq.s32.totalorder %s21, 1
      %p128 = scmp.ne.s32.totalorder %s123, %s125
      %p129 = scmp.eq.s32.totalorder %s21, 0
      %p130 = por %p128, %p129
      %p131 = scmp.ne.s32.totalorder %s123, %s125
      %p132 = scmp.eq.s32.totalorder %s26, 1
      %p133 = por %p131, %p132
      %p134 = scmp.ne.s32.totalorder %s125, %s126
      %p135 = scmp.eq.s32.totalorder %s26, 0
      %p136 = por %p134, %p135
      %p137 = scmp.ne.s32.totalorder %s125, %s126
      %p138 = scmp.eq.s32.totalorder %s27, 1
      %p139 = por %p137, %p138
      %p141 = scmp.ne.s32.totalorder %s126, %s140
      %p142 = scmp.eq.s32.totalorder %s27, 0
      %p143 = por %p141, %p142
      %s145 = sadd.s32 %s144, 1
      %p148 = scmp.eq.s32.totalorder %s21, 1
      %p149 = scmp.ne.s32.totalorder %s144, %s146
      %p150 = scmp.eq.s32.totalorder %s21, 0
      %p151 = por %p149, %p150
      %p152 = scmp.ne.s32.totalorder %s144, %s146
      %p153 = scmp.eq.s32.totalorder %s26, 1
      %p154 = por %p152, %p153
      %p155 = scmp.ne.s32.totalorder %s146, %s147
      %p156 = scmp.eq.s32.totalorder %s26, 0
      %p157 = por %p155, %p156
      %p158 = scmp.ne.s32.totalorder %s146, %s147
      %p159 = scmp.eq.s32.totalorder %s27, 1
      %p160 = por %p158, %p159
      %p162 = scmp.ne.s32.totalorder %s147, %s161
      %p163 = scmp.eq.s32.totalorder %s27, 0
      %p164 = por %p162, %p163
      %s166 = sadd.s32 %s165, 1
      %p169 = scmp.eq.s32.totalorder %s21, 1
      %p170 = scmp.ne.s32.totalorder %s165, %s167
      %p171 = scmp.eq.s32.totalorder %s21, 0
      %p172 = por %p170, %p171
      %p173 = scmp.ne.s32.totalorder %s165, %s167
      %p174 = scmp.eq.s32.totalorder %s26, 1
      %p175 = por %p173, %p174
      %p176 = scmp.ne.s32.totalorder %s167, %s168
      %p177 = scmp.eq.s32.totalorder %s26, 0
      %p178 = por %p176, %p177
      %p179 = scmp.ne.s32.totalorder %s167, %s168
      %p180 = scmp.eq.s32.totalorder %s27, 1
      %p181 = por %p179, %p180
      %p183 = scmp.ne.s32.totalorder %s168, %s182
      %p184 = scmp.eq.s32.totalorder %s27, 0
      %p185 = por %p183, %p184
      %s187 = sadd.s32 %s186, 1
      %p190 = scmp.eq.s32.totalorder %s21, 1
      %p191 = scmp.ne.s32.totalorder %s186, %s188
      %p192 = scmp.eq.s32.totalorder %s21, 0
      %p193 = por %p191, %p192
      %p194 = scmp.ne.s32.totalorder %s186, %s188
      %p195 = scmp.eq.s32.totalorder %s26, 1
      %p196 = por %p194, %p195
      %p197 = scmp.ne.s32.totalorder %s188, %s189
      %p198 = scmp.eq.s32.totalorder %s26, 0
      %p199 = por %p197, %p198
      %p200 = scmp.ne.s32.totalorder %s188, %s189
      %p201 = scmp.eq.s32.totalorder %s27, 1
      %p202 = por %p200, %p201
      %p204 = scmp.ne.s32.totalorder %s189, %s203
      %p205 = scmp.eq.s32.totalorder %s27, 0
      %p206 = por %p204, %p205
      %s208 = sadd.s32 %s207, 1
      %p211 = scmp.eq.s32.totalorder %s21, 1
      %p212 = scmp.ne.s32.totalorder %s207, %s209
      %p213 = scmp.eq.s32.totalorder %s21, 0
      %p214 = por %p212, %p213
      %p215 = scmp.ne.s32.totalorder %s207, %s209
      %p216 = scmp.eq.s32.totalorder %s26, 1
      %p217 = por %p215, %p216
      %p218 = scmp.ne.s32.totalorder %s209, %s210
      %p219 = scmp.eq.s32.totalorder %s26, 0
      %p220 = por %p218, %p219
      %p221 = scmp.ne.s32.totalorder %s209, %s210
      %p222 = scmp.eq.s32.totalorder %s27, 1
      %p223 = por %p221, %p222
      %p225 = scmp.ne.s32.totalorder %s210, %s224
      %p226 = scmp.eq.s32.totalorder %s27, 0
      %p227 = por %p225, %p226
      %s229 = sadd.s32 %s228, 1
      %p232 = scmp.eq.s32.totalorder %s21, 1
      %p233 = scmp.ne.s32.totalorder %s228, %s230
      %p234 = scmp.eq.s32.totalorder %s21, 0
      %p235 = por %p233, %p234
      %p236 = scmp.ne.s32.totalorder %s228, %s230
      %p237 = scmp.eq.s32.totalorder %s26, 1
      %p238 = por %p236, %p237
      %p239 = scmp.ne.s32.totalorder %s230, %s231
      %p240 = scmp.eq.s32.totalorder %s26, 0
      %p241 = por %p239, %p240
      %p242 = scmp.ne.s32.totalorder %s230, %s231
      %p243 = scmp.eq.s32.totalorder %s27, 1
      %p244 = por %p242, %p243
      %p246 = scmp.ne.s32.totalorder %s231, %s245
      %p247 = scmp.eq.s32.totalorder %s27, 0
      %p248 = por %p246, %p247
      %s250 = sadd.s32 %s249, 1
      %p253 = scmp.eq.s32.totalorder %s21, 1
      %p254 = scmp.ne.s32.totalorder %s249, %s251
      %p255 = scmp.eq.s32.totalorder %s21, 0
      %p256 = por %p254, %p255
      %p257 = scmp.ne.s32.totalorder %s249, %s251
      %p258 = scmp.eq.s32.totalorder %s26, 1
      %p259 = por %p257, %p258
      %p260 = scmp.ne.s32.totalorder %s251, %s252
      %p261 = scmp.eq.s32.totalorder %s26, 0
      %p262 = por %p260, %p261
      %p263 = scmp.ne.s32.totalorder %s251, %s252
      %p264 = scmp.eq.s32.totalorder %s27, 1
      %p265 = por %p263, %p264
      %p267 = scmp.ne.s32.totalorder %s252, %s266
      %p268 = scmp.eq.s32.totalorder %s27, 0
      %p269 = por %p267, %p268
      %s271 = sadd.s32 %s270, 1
      %p274 = scmp.eq.s32.totalorder %s21, 1
      %p275 = scmp.ne.s32.totalorder %s270, %s272
      %p276 = scmp.eq.s32.totalorder %s21, 0
      %p277 = por %p275, %p276
      %p278 = scmp.ne.s32.totalorder %s270, %s272
      %p279 = scmp.eq.s32.totalorder %s26, 1
      %p280 = por %p278, %p279
      %p281 = scmp.ne.s32.totalorder %s272, %s273
      %p282 = scmp.eq.s32.totalorder %s26, 0
      %p283 = por %p281, %p282
      %p284 = scmp.ne.s32.totalorder %s272, %s273
      %p285 = scmp.eq.s32.totalorder %s27, 1
      %p286 = por %p284, %p285
      %p288 = scmp.ne.s32.totalorder %s273, %s287
      %p289 = scmp.eq.s32.totalorder %s27, 0
      %p290 = por %p288, %p289
      %s291 = ssub.s32 %s21, %s28
      %p292 = scmp.eq.s32.totalorder %s291, 0
      %s294 = sadd.s32 %s293, 1
      %s295 = scalar_select %p292, %s293, %s294
      %p298 = pneg %p292
      %p299 = scmp.eq.s32.totalorder %s21, 1
      %p300 = por %p298, %p299
      %p301 = scmp.ne.s32.totalorder %s293, %s296
      %p302 = scmp.eq.s32.totalorder %s21, 0
      %p303 = por %p301, %p302
      %p304 = scmp.ne.s32.totalorder %s293, %s296
      %p305 = scmp.eq.s32.totalorder %s26, 1
      %p306 = por %p304, %p305
      %p307 = scmp.ne.s32.totalorder %s296, %s297
      %p308 = scmp.eq.s32.totalorder %s26, 0
      %p309 = por %p307, %p308
      %p310 = scmp.ne.s32.totalorder %s296, %s297
      %p311 = scmp.eq.s32.totalorder %s27, 1
      %p312 = por %p310, %p311
      %p314 = scmp.ne.s32.totalorder %s297, %s313
      %p315 = scmp.eq.s32.totalorder %s27, 0
      %p316 = por %p314, %p315
      %p317 = scmp.le.s32.totalorder 1, %s21
      %p318 = scmp.lt.s32.totalorder %s21, 3
      %p319 = pnand %p317, %p318
      %p320 = pneg %p319
      // Predicated region
      $region9: #{tpu_custom_call.1} parent=5 // pred_check
        _
      $region10: #{tpu_custom_call.1} parent=5 // pred_check_branch
        %322 = sbr.rel (%p319) target = $region12
      $region11: #{tpu_custom_call.1} parent=5 // pred_region
        %s323 = ssub.s32 %s21, 1
        // Predicated region
        $region13: #{tpu_custom_call.1} parent=11 // pred_check
          %p324 = pneg %p94
        $region14: #{tpu_custom_call.1} parent=11 // pred_check_branch
          %326 = sbr.rel (%p324) target = $region16
        $region15: #{tpu_custom_call.1} parent=11 // pred_region
          _
        $region16: #{tpu_custom_call.1} parent=11 // pred_fallthru
          _
        // Predicated region
        $region17: #{tpu_custom_call.1} parent=11 // pred_check
          %p327 = pneg %p115
        $region18: #{tpu_custom_call.1} parent=11 // pred_check_branch
          %329 = sbr.rel (%p327) target = $region20
        $region19: #{tpu_custom_call.1} parent=11 // pred_region
          _
        $region20: #{tpu_custom_call.1} parent=11 // pred_fallthru
          _
        // Predicated region
        $region21: #{tpu_custom_call.1} parent=11 // pred_check
          %p330 = pneg %p136
        $region22: #{tpu_custom_call.1} parent=11 // pred_check_branch
          %332 = sbr.rel (%p330) target = $region24
        $region23: #{tpu_custom_call.1} parent=11 // pred_region
          _
        $region24: #{tpu_custom_call.1} parent=11 // pred_fallthru
          _
        // Predicated region
        $region25: #{tpu_custom_call.1} parent=11 // pred_check
          %p333 = pneg %p157
        $region26: #{tpu_custom_call.1} parent=11 // pred_check_branch
          %335 = sbr.rel (%p333) target = $region28
        $region27: #{tpu_custom_call.1} parent=11 // pred_region
          _
        $region28: #{tpu_custom_call.1} parent=11 // pred_fallthru
          _
        // Predicated region
        $region29: #{tpu_custom_call.1} parent=11 // pred_check
          %p336 = pneg %p178
        $region30: #{tpu_custom_call.1} parent=11 // pred_check_branch
          %338 = sbr.rel (%p336) target = $region32
        $region31: #{tpu_custom_call.1} parent=11 // pred_region
          _
        $region32: #{tpu_custom_call.1} parent=11 // pred_fallthru
          _
        // Predicated region
        $region33: #{tpu_custom_call.1} parent=11 // pred_check
          %p339 = pneg %p199
        $region34: #{tpu_custom_call.1} parent=11 // pred_check_branch
          %341 = sbr.rel (%p339) target = $region36
        $region35: #{tpu_custom_call.1} parent=11 // pred_region
          _
        $region36: #{tpu_custom_call.1} parent=11 // pred_fallthru
          _
        // Predicated region
        $region37: #{tpu_custom_call.1} parent=11 // pred_check
          %p342 = pneg %p220
        $region38: #{tpu_custom_call.1} parent=11 // pred_check_branch
          %344 = sbr.rel (%p342) target = $region40
        $region39: #{tpu_custom_call.1} parent=11 // pred_region
          _
        $region40: #{tpu_custom_call.1} parent=11 // pred_fallthru
          _
        // Predicated region
        $region41: #{tpu_custom_call.1} parent=11 // pred_check
          %p345 = pneg %p241
        $region42: #{tpu_custom_call.1} parent=11 // pred_check_branch
          %347 = sbr.rel (%p345) target = $region44
        $region43: #{tpu_custom_call.1} parent=11 // pred_region
          _
        $region44: #{tpu_custom_call.1} parent=11 // pred_fallthru
          _
        // Predicated region
        $region45: #{tpu_custom_call.1} parent=11 // pred_check
          %p348 = pneg %p262
        $region46: #{tpu_custom_call.1} parent=11 // pred_check_branch
          %350 = sbr.rel (%p348) target = $region48
        $region47: #{tpu_custom_call.1} parent=11 // pred_region
          _
        $region48: #{tpu_custom_call.1} parent=11 // pred_fallthru
          _
        // Predicated region
        $region49: #{tpu_custom_call.1} parent=11 // pred_check
          %p351 = pneg %p283
        $region50: #{tpu_custom_call.1} parent=11 // pred_check_branch
          %353 = sbr.rel (%p351) target = $region52
        $region51: #{tpu_custom_call.1} parent=11 // pred_region
          _
        $region52: #{tpu_custom_call.1} parent=11 // pred_fallthru
          _
      $region12: #{tpu_custom_call.1} parent=5 // pred_fallthru
        _
      %p354 = scmp.lt.s32.totalorder %s21, 2
      // Predicated region
      $region53: #{tpu_custom_call.1} parent=5 // pred_check
        %p355 = pneg %p354
      $region54: #{tpu_custom_call.1} parent=5 // pred_check_branch
        %357 = sbr.rel (%p355) target = $region56
      $region55: #{tpu_custom_call.1} parent=5 // pred_region
        // Predicated region
        $region57: #{tpu_custom_call.1} parent=55 // pred_check
          %p358 = pneg %p41
        $region58: #{tpu_custom_call.1} parent=55 // pred_check_branch
          %360 = sbr.rel (%p358) target = $region60
        $region59: #{tpu_custom_call.1} parent=55 // pred_region
          %s361 = smul.u32 16, %s21
          %p362 = scmp.lt.s32.totalorder %s361, 31
          %s363 = scalar_select %p362, %s361, 31
          %s364 = smul.addr %s363, 8
          %s365 = scalar_lea.vmem %s0, %s364
          %s366 = smul.u32 16, %s21
        $region60: #{tpu_custom_call.1} parent=55 // pred_fallthru
          _
        // Predicated region
        $region61: #{tpu_custom_call.1} parent=55 // pred_check
          %p367 = pneg %p67
        $region62: #{tpu_custom_call.1} parent=55 // pred_check_branch
          %369 = sbr.rel (%p367) target = $region64
        $region63: #{tpu_custom_call.1} parent=55 // pred_region
          %s370 = smul.u32 16, %s21
          %p371 = scmp.lt.s32.totalorder %s370, 31
          %s372 = scalar_select %p371, %s370, 31
          %s373 = smul.addr %s372, 8
          %s374 = scalar_lea.vmem %s1, %s373
          %s375 = smul.u32 16, %s21
        $region64: #{tpu_custom_call.1} parent=55 // pred_fallthru
          _
      $region56: #{tpu_custom_call.1} parent=5 // pred_fallthru
        _
      %p376 = scmp.le.s32.totalorder 1, %s21
      %p377 = scmp.lt.s32.totalorder %s21, 3
      %p378 = pnand %p376, %p377
      %p379 = pneg %p378
      // Predicated region
      $region65: #{tpu_custom_call.1} parent=5 // pred_check
        _
      $region66: #{tpu_custom_call.1} parent=5 // pred_check_branch
        %381 = sbr.rel (%p378) target = $region68
      $region67: #{tpu_custom_call.1} parent=5 // pred_region
        %s382 = ssub.s32 %s21, 1
        %s383 = smul.u32 16, %s26
        %p384 = scmp.lt.s32.totalorder %s383, 31
        %s385 = scalar_select %p384, %s383, 31
        %s386 = smul.addr %s385, 8
        %s387 = scalar_lea.vmem %s0, %s386
        %p388 = pneg %p47
        %p389 = pneg %p44
        %s390 = smul.u32 16, %s26
        %p391 = scmp.lt.s32.totalorder %s390, 31
        %s392 = scalar_select %p391, %s390, 31
        %s393 = smul.addr %s392, 8
        %s394 = scalar_lea.vmem %s1, %s393
        %p395 = pneg %p73
        %p396 = pneg %p70
        %p397 = pneg %p94
        %p398 = pneg %p91
        %p399 = pneg %p115
        %p400 = pneg %p112
        %p401 = pneg %p136
        %p402 = pneg %p133
        %p403 = pneg %p157
        %p404 = pneg %p154
        %p405 = pneg %p178
        %p406 = pneg %p175
        %p407 = pneg %p199
        %p408 = pneg %p196
        %p409 = pneg %p220
        %p410 = pneg %p217
        %p411 = pneg %p241
        %p412 = pneg %p238
        %p413 = pneg %p262
        %p414 = pneg %p259
        %p415 = pneg %p283
        %p416 = pneg %p280
        %p417 = pneg %p309
        %p418 = pneg %p306
        %s419 = sand.u32 %s296, 1
        %s420 = scalar_lea.sflag [#allocation3], %s419
        %s421 = sand.u32 %s296, 1
        %s422 = smul.addr %s421, 128
        %s423 = scalar_lea.vmem [#allocation2], %s422
        %s424 = smul.u32 16, %s26
        %p425 = scmp.lt.s32.totalorder %s424, 31
        %s426 = scalar_select %p425, %s424, 31
        %s427 = smul.addr %s426, 8
        %s428 = scalar_lea.vmem %s0, %s427
        %s429 = smul.u32 16, %s26
        %s430 = smul.u32 16, %s26
        %p431 = scmp.lt.s32.totalorder %s430, 31
        %s432 = scalar_select %p431, %s430, 31
        %s433 = smul.addr %s432, 8
        %s434 = scalar_lea.vmem %s1, %s433
        %s435 = smul.u32 16, %s26
        %s436 = smul.u32 16, %s26
        %v437 = vld [vmem:[%s428] sm:$0xff]
        %v438 = vld [vmem:[%s428 + $0x8] sm:$0xff]
        %v439 = vld [vmem:[%s428 + $0x10] sm:$0xff]
        %v440 = vld [vmem:[%s428 + $0x18] sm:$0xff]
        %v441 = vld [vmem:[%s428 + $0x20] sm:$0xff]
        %v442 = vld [vmem:[%s428 + $0x28] sm:$0xff]
        %v443 = vld [vmem:[%s428 + $0x30] sm:$0xff]
        %v444 = vld [vmem:[%s428 + $0x38] sm:$0xff]
        %v445 = vld [vmem:[%s428 + $0x40] sm:$0xff]
        %v446 = vld [vmem:[%s428 + $0x48] sm:$0xff]
        %v447 = vld [vmem:[%s428 + $0x50] sm:$0xff]
        %v448 = vld [vmem:[%s428 + $0x58] sm:$0xff]
        %v449 = vld [vmem:[%s428 + $0x60] sm:$0xff]
        %v450 = vld [vmem:[%s428 + $0x68] sm:$0xff]
        %v451 = vld [vmem:[%s428 + $0x70] sm:$0xff]
        %v452 = vld [vmem:[%s428 + $0x78] sm:$0xff]
        %vm453 = vcmask 261120
        %v454 = vsel %vm453, %v437, 0.0
        %455 = vadd.xlane.f32.xlu0 %v454
        %v456 = vpop.xlane.xlu0 %455
        %v457 = vsel %vm453, %v438, 0.0
        %458 = vadd.xlane.f32.xlu0 %v457
        %v459 = vpop.xlane.xlu0 %458
        %v460 = vsel %vm453, %v439, 0.0
        %461 = vadd.xlane.f32.xlu0 %v460
        %v462 = vpop.xlane.xlu0 %461
        %v463 = vsel %vm453, %v440, 0.0
        %464 = vadd.xlane.f32.xlu0 %v463
        %v465 = vpop.xlane.xlu0 %464
        %v466 = vsel %vm453, %v441, 0.0
        %467 = vadd.xlane.f32.xlu0 %v466
        %v468 = vpop.xlane.xlu0 %467
        %v469 = vsel %vm453, %v442, 0.0
        %470 = vadd.xlane.f32.xlu0 %v469
        %v471 = vpop.xlane.xlu0 %470
        %v472 = vsel %vm453, %v443, 0.0
        %473 = vadd.xlane.f32.xlu0 %v472
        %v474 = vpop.xlane.xlu0 %473
        %v475 = vsel %vm453, %v444, 0.0
        %476 = vadd.xlane.f32.xlu0 %v475
        %v477 = vpop.xlane.xlu0 %476
        %v478 = vsel %vm453, %v445, 0.0
        %479 = vadd.xlane.f32.xlu0 %v478
        %v480 = vpop.xlane.xlu0 %479
        %v481 = vsel %vm453, %v446, 0.0
        %482 = vadd.xlane.f32.xlu0 %v481
        %v483 = vpop.xlane.xlu0 %482
        %v484 = vsel %vm453, %v447, 0.0
        %485 = vadd.xlane.f32.xlu0 %v484
        %v486 = vpop.xlane.xlu0 %485
        %v487 = vsel %vm453, %v448, 0.0
        %488 = vadd.xlane.f32.xlu0 %v487
        %v489 = vpop.xlane.xlu0 %488
        %v490 = vsel %vm453, %v449, 0.0
        %491 = vadd.xlane.f32.xlu0 %v490
        %v492 = vpop.xlane.xlu0 %491
        %v493 = vsel %vm453, %v450, 0.0
        %494 = vadd.xlane.f32.xlu0 %v493
        %v495 = vpop.xlane.xlu0 %494
        %v496 = vsel %vm453, %v451, 0.0
        %497 = vadd.xlane.f32.xlu0 %v496
        %v498 = vpop.xlane.xlu0 %497
        %v499 = vsel %vm453, %v452, 0.0
        %500 = vadd.xlane.f32.xlu0 %v499
        %v501 = vpop.xlane.xlu0 %500
        %v502 = vrcp.pop 32.0
        %v503 = vmul.f32 32.0, %v502
        %v504 = vsub.f32 1.0, %v503
        %v505 = vmul.f32 %v502, %v504
        %v506 = vadd.f32 %v502, %v505
        %vm507 = vweird.f32 %v502
        %v508 = vsel %vm507, %v502, %v506
        %v509 = vmul.f32 %v456, %v508
        %v510 = vmul.f32 %v459, %v508
        %v511 = vmul.f32 %v462, %v508
        %v512 = vmul.f32 %v465, %v508
        %v513 = vmul.f32 %v468, %v508
        %v514 = vmul.f32 %v471, %v508
        %v515 = vmul.f32 %v474, %v508
        %v516 = vmul.f32 %v477, %v508
        %v517 = vmul.f32 %v480, %v508
        %v518 = vmul.f32 %v483, %v508
        %v519 = vmul.f32 %v486, %v508
        %v520 = vmul.f32 %v489, %v508
        %v521 = vmul.f32 %v492, %v508
        %v522 = vmul.f32 %v495, %v508
        %v523 = vmul.f32 %v498, %v508
        %v524 = vmul.f32 %v501, %v508
        %v525 = vsub.f32 %v437, %v509
        %v526 = vsub.f32 %v438, %v510
        %v527 = vsub.f32 %v439, %v511
        %v528 = vsub.f32 %v440, %v512
        %v529 = vsub.f32 %v441, %v513
        %v530 = vsub.f32 %v442, %v514
        %v531 = vsub.f32 %v443, %v515
        %v532 = vsub.f32 %v444, %v516
        %v533 = vsub.f32 %v445, %v517
        %v534 = vsub.f32 %v446, %v518
        %v535 = vsub.f32 %v447, %v519
        %v536 = vsub.f32 %v448, %v520
        %v537 = vsub.f32 %v449, %v521
        %v538 = vsub.f32 %v450, %v522
        %v539 = vsub.f32 %v451, %v523
        %v540 = vsub.f32 %v452, %v524
        %v541 = vmul.f32 %v525, %v525
        %v542 = vmul.f32 %v526, %v526
        %v543 = vmul.f32 %v527, %v527
        %v544 = vmul.f32 %v528, %v528
        %v545 = vmul.f32 %v529, %v529
        %v546 = vmul.f32 %v530, %v530
        %v547 = vmul.f32 %v531, %v531
        %v548 = vmul.f32 %v532, %v532
        %v549 = vmul.f32 %v533, %v533
        %v550 = vmul.f32 %v534, %v534
        %v551 = vmul.f32 %v535, %v535
        %v552 = vmul.f32 %v536, %v536
        %v553 = vmul.f32 %v537, %v537
        %v554 = vmul.f32 %v538, %v538
        %v555 = vmul.f32 %v539, %v539
        %v556 = vmul.f32 %v540, %v540
        %v557 = vsel %vm453, %v541, 0.0
        %558 = vadd.xlane.f32.xlu0 %v557
        %v559 = vpop.xlane.xlu0 %558
        %v560 = vsel %vm453, %v542, 0.0
        %561 = vadd.xlane.f32.xlu0 %v560
        %v562 = vpop.xlane.xlu0 %561
        %v563 = vsel %vm453, %v543, 0.0
        %564 = vadd.xlane.f32.xlu0 %v563
        %v565 = vpop.xlane.xlu0 %564
        %v566 = vsel %vm453, %v544, 0.0
        %567 = vadd.xlane.f32.xlu0 %v566
        %v568 = vpop.xlane.xlu0 %567
        %v569 = vsel %vm453, %v545, 0.0
        %570 = vadd.xlane.f32.xlu0 %v569
        %v571 = vpop.xlane.xlu0 %570
        %v572 = vsel %vm453, %v546, 0.0
        %573 = vadd.xlane.f32.xlu0 %v572
        %v574 = vpop.xlane.xlu0 %573
        %v575 = vsel %vm453, %v547, 0.0
        %576 = vadd.xlane.f32.xlu0 %v575
        %v577 = vpop.xlane.xlu0 %576
        %v578 = vsel %vm453, %v548, 0.0
        %579 = vadd.xlane.f32.xlu0 %v578
        %v580 = vpop.xlane.xlu0 %579
        %v581 = vsel %vm453, %v549, 0.0
        %582 = vadd.xlane.f32.xlu0 %v581
        %v583 = vpop.xlane.xlu0 %582
        %v584 = vsel %vm453, %v550, 0.0
        %585 = vadd.xlane.f32.xlu0 %v584
        %v586 = vpop.xlane.xlu0 %585
        %v587 = vsel %vm453, %v551, 0.0
        %588 = vadd.xlane.f32.xlu0 %v587
        %v589 = vpop.xlane.xlu0 %588
        %v590 = vsel %vm453, %v552, 0.0
        %591 = vadd.xlane.f32.xlu0 %v590
        %v592 = vpop.xlane.xlu0 %591
        %v593 = vsel %vm453, %v553, 0.0
        %594 = vadd.xlane.f32.xlu0 %v593
        %v595 = vpop.xlane.xlu0 %594
        %v596 = vsel %vm453, %v554, 0.0
        %597 = vadd.xlane.f32.xlu0 %v596
        %v598 = vpop.xlane.xlu0 %597
        %v599 = vsel %vm453, %v555, 0.0
        %600 = vadd.xlane.f32.xlu0 %v599
        %v601 = vpop.xlane.xlu0 %600
        %v602 = vsel %vm453, %v556, 0.0
        %603 = vadd.xlane.f32.xlu0 %v602
        %v604 = vpop.xlane.xlu0 %603
        %v605 = vmul.f32 %v559, %v508
        %v606 = vmul.f32 %v562, %v508
        %v607 = vmul.f32 %v565, %v508
        %v608 = vmul.f32 %v568, %v508
        %v609 = vmul.f32 %v571, %v508
        %v610 = vmul.f32 %v574, %v508
        %v611 = vmul.f32 %v577, %v508
        %v612 = vmul.f32 %v580, %v508
        %v613 = vmul.f32 %v583, %v508
        %v614 = vmul.f32 %v586, %v508
        %v615 = vmul.f32 %v589, %v508
        %v616 = vmul.f32 %v592, %v508
        %v617 = vmul.f32 %v595, %v508
        %v618 = vmul.f32 %v598, %v508
        %v619 = vmul.f32 %v601, %v508
        %v620 = vmul.f32 %v604, %v508
        %v621 = vadd.f32 %v605, 1e-05
        %v622 = vadd.f32 %v606, 1e-05
        %v623 = vadd.f32 %v607, 1e-05
        %v624 = vadd.f32 %v608, 1e-05
        %v625 = vadd.f32 %v609, 1e-05
        %v626 = vadd.f32 %v610, 1e-05
        %v627 = vadd.f32 %v611, 1e-05
        %v628 = vadd.f32 %v612, 1e-05
        %v629 = vadd.f32 %v613, 1e-05
        %v630 = vadd.f32 %v614, 1e-05
        %v631 = vadd.f32 %v615, 1e-05
        %v632 = vadd.f32 %v616, 1e-05
        %v633 = vadd.f32 %v617, 1e-05
        %v634 = vadd.f32 %v618, 1e-05
        %v635 = vadd.f32 %v619, 1e-05
        %v636 = vadd.f32 %v620, 1e-05
        %v637 = vrsqrt.pop %v621
        %v638 = vmul.f32 %v637, %v621
        %v639 = vmul.f32 %v638, %v637
        %v640 = vmul.f32 0.5, %v639
        %v641 = vsub.f32 1.5, %v640
        %v642 = vmul.f32 %v637, %v641
        %vm643 = vweird.f32 %v621
        %vm644 = vweird.f32 %v637
        %vm645 = vmor %vm643, %vm644
        %v646 = vsel %vm645, %v637, %v642
        %v647 = vrsqrt.pop %v622
        %v648 = vmul.f32 %v647, %v622
        %v649 = vmul.f32 %v648, %v647
        %v650 = vmul.f32 0.5, %v649
        %v651 = vsub.f32 1.5, %v650
        %v652 = vmul.f32 %v647, %v651
        %vm653 = vweird.f32 %v622
        %vm654 = vweird.f32 %v647
        %vm655 = vmor %vm653, %vm654
        %v656 = vsel %vm655, %v647, %v652
        %v657 = vrsqrt.pop %v623
        %v658 = vmul.f32 %v657, %v623
        %v659 = vmul.f32 %v658, %v657
        %v660 = vmul.f32 0.5, %v659
        %v661 = vsub.f32 1.5, %v660
        %v662 = vmul.f32 %v657, %v661
        %vm663 = vweird.f32 %v623
        %vm664 = vweird.f32 %v657
        %vm665 = vmor %vm663, %vm664
        %v666 = vsel %vm665, %v657, %v662
        %v667 = vrsqrt.pop %v624
        %v668 = vmul.f32 %v667, %v624
        %v669 = vmul.f32 %v668, %v667
        %v670 = vmul.f32 0.5, %v669
        %v671 = vsub.f32 1.5, %v670
        %v672 = vmul.f32 %v667, %v671
        %vm673 = vweird.f32 %v624
        %vm674 = vweird.f32 %v667
        %vm675 = vmor %vm673, %vm674
        %v676 = vsel %vm675, %v667, %v672
        %v677 = vrsqrt.pop %v625
        %v678 = vmul.f32 %v677, %v625
        %v679 = vmul.f32 %v678, %v677
        %v680 = vmul.f32 0.5, %v679
        %v681 = vsub.f32 1.5, %v680
        %v682 = vmul.f32 %v677, %v681
        %vm683 = vweird.f32 %v625
        %vm684 = vweird.f32 %v677
        %vm685 = vmor %vm683, %vm684
        %v686 = vsel %vm685, %v677, %v682
        %v687 = vrsqrt.pop %v626
        %v688 = vmul.f32 %v687, %v626
        %v689 = vmul.f32 %v688, %v687
        %v690 = vmul.f32 0.5, %v689
        %v691 = vsub.f32 1.5, %v690
        %v692 = vmul.f32 %v687, %v691
        %vm693 = vweird.f32 %v626
        %vm694 = vweird.f32 %v687
        %vm695 = vmor %vm693, %vm694
        %v696 = vsel %vm695, %v687, %v692
        %v697 = vrsqrt.pop %v627
        %v698 = vmul.f32 %v697, %v627
        %v699 = vmul.f32 %v698, %v697
        %v700 = vmul.f32 0.5, %v699
        %v701 = vsub.f32 1.5, %v700
        %v702 = vmul.f32 %v697, %v701
        %vm703 = vweird.f32 %v627
        %vm704 = vweird.f32 %v697
        %vm705 = vmor %vm703, %vm704
        %v706 = vsel %vm705, %v697, %v702
        %v707 = vrsqrt.pop %v628
        %v708 = vmul.f32 %v707, %v628
        %v709 = vmul.f32 %v708, %v707
        %v710 = vmul.f32 0.5, %v709
        %v711 = vsub.f32 1.5, %v710
        %v712 = vmul.f32 %v707, %v711
        %vm713 = vweird.f32 %v628
        %vm714 = vweird.f32 %v707
        %vm715 = vmor %vm713, %vm714
        %v716 = vsel %vm715, %v707, %v712
        %v717 = vrsqrt.pop %v629
        %v718 = vmul.f32 %v717, %v629
        %v719 = vmul.f32 %v718, %v717
        %v720 = vmul.f32 0.5, %v719
        %v721 = vsub.f32 1.5, %v720
        %v722 = vmul.f32 %v717, %v721
        %vm723 = vweird.f32 %v629
        %vm724 = vweird.f32 %v717
        %vm725 = vmor %vm723, %vm724
        %v726 = vsel %vm725, %v717, %v722
        %v727 = vrsqrt.pop %v630
        %v728 = vmul.f32 %v727, %v630
        %v729 = vmul.f32 %v728, %v727
        %v730 = vmul.f32 0.5, %v729
        %v731 = vsub.f32 1.5, %v730
        %v732 = vmul.f32 %v727, %v731
        %vm733 = vweird.f32 %v630
        %vm734 = vweird.f32 %v727
        %vm735 = vmor %vm733, %vm734
        %v736 = vsel %vm735, %v727, %v732
        %v737 = vrsqrt.pop %v631
        %v738 = vmul.f32 %v737, %v631
        %v739 = vmul.f32 %v738, %v737
        %v740 = vmul.f32 0.5, %v739
        %v741 = vsub.f32 1.5, %v740
        %v742 = vmul.f32 %v737, %v741
        %vm743 = vweird.f32 %v631
        %vm744 = vweird.f32 %v737
        %vm745 = vmor %vm743, %vm744
        %v746 = vsel %vm745, %v737, %v742
        %v747 = vrsqrt.pop %v632
        %v748 = vmul.f32 %v747, %v632
        %v749 = vmul.f32 %v748, %v747
        %v750 = vmul.f32 0.5, %v749
        %v751 = vsub.f32 1.5, %v750
        %v752 = vmul.f32 %v747, %v751
        %vm753 = vweird.f32 %v632
        %vm754 = vweird.f32 %v747
        %vm755 = vmor %vm753, %vm754
        %v756 = vsel %vm755, %v747, %v752
        %v757 = vrsqrt.pop %v633
        %v758 = vmul.f32 %v757, %v633
        %v759 = vmul.f32 %v758, %v757
        %v760 = vmul.f32 0.5, %v759
        %v761 = vsub.f32 1.5, %v760
        %v762 = vmul.f32 %v757, %v761
        %vm763 = vweird.f32 %v633
        %vm764 = vweird.f32 %v757
        %vm765 = vmor %vm763, %vm764
        %v766 = vsel %vm765, %v757, %v762
        %v767 = vrsqrt.pop %v634
        %v768 = vmul.f32 %v767, %v634
        %v769 = vmul.f32 %v768, %v767
        %v770 = vmul.f32 0.5, %v769
        %v771 = vsub.f32 1.5, %v770
        %v772 = vmul.f32 %v767, %v771
        %vm773 = vweird.f32 %v634
        %vm774 = vweird.f32 %v767
        %vm775 = vmor %vm773, %vm774
        %v776 = vsel %vm775, %v767, %v772
        %v777 = vrsqrt.pop %v635
        %v778 = vmul.f32 %v777, %v635
        %v779 = vmul.f32 %v778, %v777
        %v780 = vmul.f32 0.5, %v779
        %v781 = vsub.f32 1.5, %v780
        %v782 = vmul.f32 %v777, %v781
        %vm783 = vweird.f32 %v635
        %vm784 = vweird.f32 %v777
        %vm785 = vmor %vm783, %vm784
        %v786 = vsel %vm785, %v777, %v782
        %v787 = vrsqrt.pop %v636
        %v788 = vmul.f32 %v787, %v636
        %v789 = vmul.f32 %v788, %v787
        %v790 = vmul.f32 0.5, %v789
        %v791 = vsub.f32 1.5, %v790
        %v792 = vmul.f32 %v787, %v791
        %vm793 = vweird.f32 %v636
        %vm794 = vweird.f32 %v787
        %vm795 = vmor %vm793, %vm794
        %v796 = vsel %vm795, %v787, %v792
        %v797 = vmul.f32 %v525, %v646
        %v798 = vmul.f32 %v526, %v656
        %v799 = vmul.f32 %v527, %v666
        %v800 = vmul.f32 %v528, %v676
        %v801 = vmul.f32 %v529, %v686
        %v802 = vmul.f32 %v530, %v696
        %v803 = vmul.f32 %v531, %v706
        %v804 = vmul.f32 %v532, %v716
        %v805 = vmul.f32 %v533, %v726
        %v806 = vmul.f32 %v534, %v736
        %v807 = vmul.f32 %v535, %v746
        %v808 = vmul.f32 %v536, %v756
        %v809 = vmul.f32 %v537, %v766
        %v810 = vmul.f32 %v538, %v776
        %v811 = vmul.f32 %v539, %v786
        %v812 = vmul.f32 %v540, %v796
        %v813 = vld [vmem:[%s2] sm:$0x1]
        %v815 = vperm.slane %v813, 0
        %v817 = vmul.f32 %v797, %v815
        %v818 = vmul.f32 %v798, %v815
        %v819 = vmul.f32 %v799, %v815
        %v820 = vmul.f32 %v800, %v815
        %v821 = vmul.f32 %v801, %v815
        %v822 = vmul.f32 %v802, %v815
        %v823 = vmul.f32 %v803, %v815
        %v824 = vmul.f32 %v804, %v815
        %v825 = vmul.f32 %v805, %v815
        %v826 = vmul.f32 %v806, %v815
        %v827 = vmul.f32 %v807, %v815
        %v828 = vmul.f32 %v808, %v815
        %v829 = vmul.f32 %v809, %v815
        %v830 = vmul.f32 %v810, %v815
        %v831 = vmul.f32 %v811, %v815
        %v832 = vmul.f32 %v812, %v815
        %v833 = vld [vmem:[%s3] sm:$0x1]
        %v835 = vperm.slane %v833, 0
        %v837 = vadd.f32 %v817, %v835
        %v838 = vadd.f32 %v818, %v835
        %v839 = vadd.f32 %v819, %v835
        %v840 = vadd.f32 %v820, %v835
        %v841 = vadd.f32 %v821, %v835
        %v842 = vadd.f32 %v822, %v835
        %v843 = vadd.f32 %v823, %v835
        %v844 = vadd.f32 %v824, %v835
        %v845 = vadd.f32 %v825, %v835
        %v846 = vadd.f32 %v826, %v835
        %v847 = vadd.f32 %v827, %v835
        %v848 = vadd.f32 %v828, %v835
        %v849 = vadd.f32 %v829, %v835
        %v850 = vadd.f32 %v830, %v835
        %v851 = vadd.f32 %v831, %v835
        %v852 = vadd.f32 %v832, %v835
        %vm853 = vcmp.ge.f32.partialorder %v837, 0.0
        %vm854 = vcmp.ge.f32.partialorder %v838, 0.0
        %vm855 = vcmp.ge.f32.partialorder %v839, 0.0
        %vm856 = vcmp.ge.f32.partialorder %v840, 0.0
        %vm857 = vcmp.ge.f32.partialorder %v841, 0.0
        %vm858 = vcmp.ge.f32.partialorder %v842, 0.0
        %vm859 = vcmp.ge.f32.partialorder %v843, 0.0
        %vm860 = vcmp.ge.f32.partialorder %v844, 0.0
        %vm861 = vcmp.ge.f32.partialorder %v845, 0.0
        %vm862 = vcmp.ge.f32.partialorder %v846, 0.0
        %vm863 = vcmp.ge.f32.partialorder %v847, 0.0
        %vm864 = vcmp.ge.f32.partialorder %v848, 0.0
        %vm865 = vcmp.ge.f32.partialorder %v849, 0.0
        %vm866 = vcmp.ge.f32.partialorder %v850, 0.0
        %vm867 = vcmp.ge.f32.partialorder %v851, 0.0
        %vm868 = vcmp.ge.f32.partialorder %v852, 0.0
        %v869 = vmul.f32 %v837, 0.2
        %v870 = vmul.f32 %v838, 0.2
        %v871 = vmul.f32 %v839, 0.2
        %v872 = vmul.f32 %v840, 0.2
        %v873 = vmul.f32 %v841, 0.2
        %v874 = vmul.f32 %v842, 0.2
        %v875 = vmul.f32 %v843, 0.2
        %v876 = vmul.f32 %v844, 0.2
        %v877 = vmul.f32 %v845, 0.2
        %v878 = vmul.f32 %v846, 0.2
        %v879 = vmul.f32 %v847, 0.2
        %v880 = vmul.f32 %v848, 0.2
        %v881 = vmul.f32 %v849, 0.2
        %v882 = vmul.f32 %v850, 0.2
        %v883 = vmul.f32 %v851, 0.2
        %v884 = vmul.f32 %v852, 0.2
        %v885 = vsel %vm853, %v837, %v869
        %v886 = vsel %vm854, %v838, %v870
        %v887 = vsel %vm855, %v839, %v871
        %v888 = vsel %vm856, %v840, %v872
        %v889 = vsel %vm857, %v841, %v873
        %v890 = vsel %vm858, %v842, %v874
        %v891 = vsel %vm859, %v843, %v875
        %v892 = vsel %vm860, %v844, %v876
        %v893 = vsel %vm861, %v845, %v877
        %v894 = vsel %vm862, %v846, %v878
        %v895 = vsel %vm863, %v847, %v879
        %v896 = vsel %vm864, %v848, %v880
        %v897 = vsel %vm865, %v849, %v881
        %v898 = vsel %vm866, %v850, %v882
        %v899 = vsel %vm867, %v851, %v883
        %v900 = vsel %vm868, %v852, %v884
        %v901 = vld [vmem:[%s434] sm:$0xff]
        %v902 = vld [vmem:[%s434 + $0x8] sm:$0xff]
        %v903 = vld [vmem:[%s434 + $0x10] sm:$0xff]
        %v904 = vld [vmem:[%s434 + $0x18] sm:$0xff]
        %v905 = vld [vmem:[%s434 + $0x20] sm:$0xff]
        %v906 = vld [vmem:[%s434 + $0x28] sm:$0xff]
        %v907 = vld [vmem:[%s434 + $0x30] sm:$0xff]
        %v908 = vld [vmem:[%s434 + $0x38] sm:$0xff]
        %v909 = vld [vmem:[%s434 + $0x40] sm:$0xff]
        %v910 = vld [vmem:[%s434 + $0x48] sm:$0xff]
        %v911 = vld [vmem:[%s434 + $0x50] sm:$0xff]
        %v912 = vld [vmem:[%s434 + $0x58] sm:$0xff]
        %v913 = vld [vmem:[%s434 + $0x60] sm:$0xff]
        %v914 = vld [vmem:[%s434 + $0x68] sm:$0xff]
        %v915 = vld [vmem:[%s434 + $0x70] sm:$0xff]
        %v916 = vld [vmem:[%s434 + $0x78] sm:$0xff]
        %v917 = vld [vmem:[%s4] sm:$0xff]
        %v918 = vld [vmem:[%s4 + $0x8] sm:$0xff]
        %v919 = vld [vmem:[%s5] sm:$0x1]
        %v921 = vperm.slane %v919, 0
        %vm923 = vcmask 130048
        %v925 = vsel %vm923, %v901, 0
        %v928 = vsel %vm923, %v902, 0
        %v931 = vsel %vm923, %v903, 0
        %v934 = vsel %vm923, %v904, 0
        %v937 = vsel %vm923, %v905, 0
        %v940 = vsel %vm923, %v906, 0
        %v943 = vsel %vm923, %v907, 0
        %v946 = vsel %vm923, %v908, 0
        %v949 = vsel %vm923, %v909, 0
        %v952 = vsel %vm923, %v910, 0
        %v955 = vsel %vm923, %v911, 0
        %v958 = vsel %vm923, %v912, 0
        %v961 = vsel %vm923, %v913, 0
        %v964 = vsel %vm923, %v914, 0
        %v967 = vsel %vm923, %v915, 0
        %v970 = vsel %vm923, %v916, 0
        %972 = vmatpush.msra.mxu0 0.0
        %973 = vmatpush.msra.mxu0 0.0
        %974 = vmatpush.msra.mxu0 0.0
        %975 = vmatpush.msra.mxu0 0.0
        %976 = vmatpush.msra.mxu0 0.0
        %977 = vmatpush.msra.mxu0 0.0
        %978 = vmatpush.msra.mxu0 0.0
        %979 = vmatpush.msra.mxu0 0.0
        %980 = vmatpush.msra.mxu0 0.0
        %981 = vmatpush.msra.mxu0 0.0
        %982 = vmatpush.msra.mxu0 0.0
        %983 = vmatpush.msra.mxu0 0.0
        %984 = vmatpush.msra.mxu0 0.0
        %985 = vmatpush.msra.mxu0 0.0
        %986 = vmatpush.msra.mxu0 %v918
        %987 = vmatpush.msra.mxu0 %v917
        %988 = vmatmul.f32.gmra.mxu0 %v925
        %v989 = vpop.f32.mrf.mxu0
        %v990 = vadd.f32 %v921, %v989
        %991 = vmatmul.f32.gmra.mxu0 %v928
        %v992 = vpop.f32.mrf.mxu0
        %v993 = vadd.f32 %v921, %v992
        %994 = vmatmul.f32.gmra.mxu0 %v931
        %v995 = vpop.f32.mrf.mxu0
        %v996 = vadd.f32 %v921, %v995
        %997 = vmatmul.f32.gmra.mxu0 %v934
        %v998 = vpop.f32.mrf.mxu0
        %v999 = vadd.f32 %v921, %v998
        %1000 = vmatmul.f32.gmra.mxu0 %v937
        %v1001 = vpop.f32.mrf.mxu0
        %v1002 = vadd.f32 %v921, %v1001
        %1003 = vmatmul.f32.gmra.mxu0 %v940
        %v1004 = vpop.f32.mrf.mxu0
        %v1005 = vadd.f32 %v921, %v1004
        %1006 = vmatmul.f32.gmra.mxu0 %v943
        %v1007 = vpop.f32.mrf.mxu0
        %v1008 = vadd.f32 %v921, %v1007
        %1009 = vmatmul.f32.gmra.mxu0 %v946
        %v1010 = vpop.f32.mrf.mxu0
        %v1011 = vadd.f32 %v921, %v1010
        %1012 = vmatmul.f32.gmra.mxu0 %v949
        %v1013 = vpop.f32.mrf.mxu0
        %v1014 = vadd.f32 %v921, %v1013
        %1015 = vmatmul.f32.gmra.mxu0 %v952
        %v1016 = vpop.f32.mrf.mxu0
        %v1017 = vadd.f32 %v921, %v1016
        %1018 = vmatmul.f32.gmra.mxu0 %v955
        %v1019 = vpop.f32.mrf.mxu0
        %v1020 = vadd.f32 %v921, %v1019
        %1021 = vmatmul.f32.gmra.mxu0 %v958
        %v1022 = vpop.f32.mrf.mxu0
        %v1023 = vadd.f32 %v921, %v1022
        %1024 = vmatmul.f32.gmra.mxu0 %v961
        %v1025 = vpop.f32.mrf.mxu0
        %v1026 = vadd.f32 %v921, %v1025
        %1027 = vmatmul.f32.gmra.mxu0 %v964
        %v1028 = vpop.f32.mrf.mxu0
        %v1029 = vadd.f32 %v921, %v1028
        %1030 = vmatmul.f32.gmra.mxu0 %v967
        %v1031 = vpop.f32.mrf.mxu0
        %v1032 = vadd.f32 %v921, %v1031
        %1033 = vmatmul.f32.gmra.mxu0 %v970
        %v1034 = vpop.f32.mrf.mxu0
        %v1035 = vadd.f32 %v921, %v1034
        %1036 = vdwg.mxu0
        %vm1037 = vcmp.ge.f32.partialorder %v990, 0.0
        %vm1038 = vcmp.ge.f32.partialorder %v993, 0.0
        %vm1039 = vcmp.ge.f32.partialorder %v996, 0.0
        %vm1040 = vcmp.ge.f32.partialorder %v999, 0.0
        %vm1041 = vcmp.ge.f32.partialorder %v1002, 0.0
        %vm1042 = vcmp.ge.f32.partialorder %v1005, 0.0
        %vm1043 = vcmp.ge.f32.partialorder %v1008, 0.0
        %vm1044 = vcmp.ge.f32.partialorder %v1011, 0.0
        %vm1045 = vcmp.ge.f32.partialorder %v1014, 0.0
        %vm1046 = vcmp.ge.f32.partialorder %v1017, 0.0
        %vm1047 = vcmp.ge.f32.partialorder %v1020, 0.0
        %vm1048 = vcmp.ge.f32.partialorder %v1023, 0.0
        %vm1049 = vcmp.ge.f32.partialorder %v1026, 0.0
        %vm1050 = vcmp.ge.f32.partialorder %v1029, 0.0
        %vm1051 = vcmp.ge.f32.partialorder %v1032, 0.0
        %vm1052 = vcmp.ge.f32.partialorder %v1035, 0.0
        %v1053 = vmul.f32 %v990, 0.01
        %v1054 = vmul.f32 %v993, 0.01
        %v1055 = vmul.f32 %v996, 0.01
        %v1056 = vmul.f32 %v999, 0.01
        %v1057 = vmul.f32 %v1002, 0.01
        %v1058 = vmul.f32 %v1005, 0.01
        %v1059 = vmul.f32 %v1008, 0.01
        %v1060 = vmul.f32 %v1011, 0.01
        %v1061 = vmul.f32 %v1014, 0.01
        %v1062 = vmul.f32 %v1017, 0.01
        %v1063 = vmul.f32 %v1020, 0.01
        %v1064 = vmul.f32 %v1023, 0.01
        %v1065 = vmul.f32 %v1026, 0.01
        %v1066 = vmul.f32 %v1029, 0.01
        %v1067 = vmul.f32 %v1032, 0.01
        %v1068 = vmul.f32 %v1035, 0.01
        %v1069 = vsel %vm1037, %v990, %v1053
        %v1070 = vsel %vm1038, %v993, %v1054
        %v1071 = vsel %vm1039, %v996, %v1055
        %v1072 = vsel %vm1040, %v999, %v1056
        %v1073 = vsel %vm1041, %v1002, %v1057
        %v1074 = vsel %vm1042, %v1005, %v1058
        %v1075 = vsel %vm1043, %v1008, %v1059
        %v1076 = vsel %vm1044, %v1011, %v1060
        %v1077 = vsel %vm1045, %v1014, %v1061
        %v1078 = vsel %vm1046, %v1017, %v1062
        %v1079 = vsel %vm1047, %v1020, %v1063
        %v1080 = vsel %vm1048, %v1023, %v1064
        %v1081 = vsel %vm1049, %v1026, %v1065
        %v1082 = vsel %vm1050, %v1029, %v1066
        %v1083 = vsel %vm1051, %v1032, %v1067
        %v1084 = vsel %vm1052, %v1035, %v1068
        %v1085 = vld [vmem:[%s6] sm:$0xff]
        %v1086 = vld [vmem:[%s6 + $0x8] sm:$0xff]
        %v1087 = vld [vmem:[%s6 + $0x10] sm:$0xff]
        %v1088 = vld [vmem:[%s6 + $0x18] sm:$0xff]
        %v1090 = vsel %vm453, %v1069, 0
        %v1093 = vsel %vm453, %v1070, 0
        %v1096 = vsel %vm453, %v1071, 0
        %v1099 = vsel %vm453, %v1072, 0
        %v1102 = vsel %vm453, %v1073, 0
        %v1105 = vsel %vm453, %v1074, 0
        %v1108 = vsel %vm453, %v1075, 0
        %v1111 = vsel %vm453, %v1076, 0
        %v1114 = vsel %vm453, %v1077, 0
        %v1117 = vsel %vm453, %v1078, 0
        %v1120 = vsel %vm453, %v1079, 0
        %v1123 = vsel %vm453, %v1080, 0
        %v1126 = vsel %vm453, %v1081, 0
        %v1129 = vsel %vm453, %v1082, 0
        %v1132 = vsel %vm453, %v1083, 0
        %v1135 = vsel %vm453, %v1084, 0
        %1137 = vmatpush.msra.mxu0 0.0
        %1138 = vmatpush.msra.mxu0 0.0
        %1139 = vmatpush.msra.mxu0 0.0
        %1140 = vmatpush.msra.mxu0 0.0
        %1141 = vmatpush.msra.mxu0 0.0
        %1142 = vmatpush.msra.mxu0 0.0
        %1143 = vmatpush.msra.mxu0 0.0
        %1144 = vmatpush.msra.mxu0 0.0
        %1145 = vmatpush.msra.mxu0 0.0
        %1146 = vmatpush.msra.mxu0 0.0
        %1147 = vmatpush.msra.mxu0 0.0
        %1148 = vmatpush.msra.mxu0 0.0
        %1149 = vmatpush.msra.mxu0 %v1088
        %1150 = vmatpush.msra.mxu0 %v1087
        %1151 = vmatpush.msra.mxu0 %v1086
        %1152 = vmatpush.msra.mxu0 %v1085
        %1153 = vmatmul.f32.gmra.mxu0 %v1090
        %v1154 = vpop.f32.mrf.mxu0
        %v1155 = vadd.f32 0.0, %v1154
        %1156 = vmatmul.f32.gmra.mxu0 %v1093
        %v1157 = vpop.f32.mrf.mxu0
        %v1158 = vadd.f32 0.0, %v1157
        %1159 = vmatmul.f32.gmra.mxu0 %v1096
        %v1160 = vpop.f32.mrf.mxu0
        %v1161 = vadd.f32 0.0, %v1160
        %1162 = vmatmul.f32.gmra.mxu0 %v1099
        %v1163 = vpop.f32.mrf.mxu0
        %v1164 = vadd.f32 0.0, %v1163
        %1165 = vmatmul.f32.gmra.mxu0 %v1102
        %v1166 = vpop.f32.mrf.mxu0
        %v1167 = vadd.f32 0.0, %v1166
        %1168 = vmatmul.f32.gmra.mxu0 %v1105
        %v1169 = vpop.f32.mrf.mxu0
        %v1170 = vadd.f32 0.0, %v1169
        %1171 = vmatmul.f32.gmra.mxu0 %v1108
        %v1172 = vpop.f32.mrf.mxu0
        %v1173 = vadd.f32 0.0, %v1172
        %1174 = vmatmul.f32.gmra.mxu0 %v1111
        %v1175 = vpop.f32.mrf.mxu0
        %v1176 = vadd.f32 0.0, %v1175
        %1177 = vmatmul.f32.gmra.mxu0 %v1114
        %v1178 = vpop.f32.mrf.mxu0
        %v1179 = vadd.f32 0.0, %v1178
        %1180 = vmatmul.f32.gmra.mxu0 %v1117
        %v1181 = vpop.f32.mrf.mxu0
        %v1182 = vadd.f32 0.0, %v1181
        %1183 = vmatmul.f32.gmra.mxu0 %v1120
        %v1184 = vpop.f32.mrf.mxu0
        %v1185 = vadd.f32 0.0, %v1184
        %1186 = vmatmul.f32.gmra.mxu0 %v1123
        %v1187 = vpop.f32.mrf.mxu0
        %v1188 = vadd.f32 0.0, %v1187
        %1189 = vmatmul.f32.gmra.mxu0 %v1126
        %v1190 = vpop.f32.mrf.mxu0
        %v1191 = vadd.f32 0.0, %v1190
        %1192 = vmatmul.f32.gmra.mxu0 %v1129
        %v1193 = vpop.f32.mrf.mxu0
        %v1194 = vadd.f32 0.0, %v1193
        %1195 = vmatmul.f32.gmra.mxu0 %v1132
        %v1196 = vpop.f32.mrf.mxu0
        %v1197 = vadd.f32 0.0, %v1196
        %1198 = vmatmul.f32.gmra.mxu0 %v1135
        %v1199 = vpop.f32.mrf.mxu0
        %v1200 = vadd.f32 0.0, %v1199
        %1201 = vdwg.mxu0
        %v1202 = vadd.f32 %v990, %v1155
        %v1203 = vadd.f32 %v993, %v1158
        %v1204 = vadd.f32 %v996, %v1161
        %v1205 = vadd.f32 %v999, %v1164
        %v1206 = vadd.f32 %v1002, %v1167
        %v1207 = vadd.f32 %v1005, %v1170
        %v1208 = vadd.f32 %v1008, %v1173
        %v1209 = vadd.f32 %v1011, %v1176
        %v1210 = vadd.f32 %v1014, %v1179
        %v1211 = vadd.f32 %v1017, %v1182
        %v1212 = vadd.f32 %v1020, %v1185
        %v1213 = vadd.f32 %v1023, %v1188
        %v1214 = vadd.f32 %v1026, %v1191
        %v1215 = vadd.f32 %v1029, %v1194
        %v1216 = vadd.f32 %v1032, %v1197
        %v1217 = vadd.f32 %v1035, %v1200
        %v1218 = vld [vmem:[%s7] sm:$0x1]
        %v1220 = vperm.slane %v1218, 0
        %v1222 = vadd.f32 %v1202, %v1220
        %v1223 = vadd.f32 %v1203, %v1220
        %v1224 = vadd.f32 %v1204, %v1220
        %v1225 = vadd.f32 %v1205, %v1220
        %v1226 = vadd.f32 %v1206, %v1220
        %v1227 = vadd.f32 %v1207, %v1220
        %v1228 = vadd.f32 %v1208, %v1220
        %v1229 = vadd.f32 %v1209, %v1220
        %v1230 = vadd.f32 %v1210, %v1220
        %v1231 = vadd.f32 %v1211, %v1220
        %v1232 = vadd.f32 %v1212, %v1220
        %v1233 = vadd.f32 %v1213, %v1220
        %v1234 = vadd.f32 %v1214, %v1220
        %v1235 = vadd.f32 %v1215, %v1220
        %v1236 = vadd.f32 %v1216, %v1220
        %v1237 = vadd.f32 %v1217, %v1220
        %vm1238 = vcmp.ge.f32.partialorder %v1222, 0.0
        %vm1239 = vcmp.ge.f32.partialorder %v1223, 0.0
        %vm1240 = vcmp.ge.f32.partialorder %v1224, 0.0
        %vm1241 = vcmp.ge.f32.partialorder %v1225, 0.0
        %vm1242 = vcmp.ge.f32.partialorder %v1226, 0.0
        %vm1243 = vcmp.ge.f32.partialorder %v1227, 0.0
        %vm1244 = vcmp.ge.f32.partialorder %v1228, 0.0
        %vm1245 = vcmp.ge.f32.partialorder %v1229, 0.0
        %vm1246 = vcmp.ge.f32.partialorder %v1230, 0.0
        %vm1247 = vcmp.ge.f32.partialorder %v1231, 0.0
        %vm1248 = vcmp.ge.f32.partialorder %v1232, 0.0
        %vm1249 = vcmp.ge.f32.partialorder %v1233, 0.0
        %vm1250 = vcmp.ge.f32.partialorder %v1234, 0.0
        %vm1251 = vcmp.ge.f32.partialorder %v1235, 0.0
        %vm1252 = vcmp.ge.f32.partialorder %v1236, 0.0
        %vm1253 = vcmp.ge.f32.partialorder %v1237, 0.0
        %v1254 = vmul.f32 %v1222, 0.01
        %v1255 = vmul.f32 %v1223, 0.01
        %v1256 = vmul.f32 %v1224, 0.01
        %v1257 = vmul.f32 %v1225, 0.01
        %v1258 = vmul.f32 %v1226, 0.01
        %v1259 = vmul.f32 %v1227, 0.01
        %v1260 = vmul.f32 %v1228, 0.01
        %v1261 = vmul.f32 %v1229, 0.01
        %v1262 = vmul.f32 %v1230, 0.01
        %v1263 = vmul.f32 %v1231, 0.01
        %v1264 = vmul.f32 %v1232, 0.01
        %v1265 = vmul.f32 %v1233, 0.01
        %v1266 = vmul.f32 %v1234, 0.01
        %v1267 = vmul.f32 %v1235, 0.01
        %v1268 = vmul.f32 %v1236, 0.01
        %v1269 = vmul.f32 %v1237, 0.01
        %v1270 = vsel %vm1238, %v1222, %v1254
        %v1271 = vsel %vm1239, %v1223, %v1255
        %v1272 = vsel %vm1240, %v1224, %v1256
        %v1273 = vsel %vm1241, %v1225, %v1257
        %v1274 = vsel %vm1242, %v1226, %v1258
        %v1275 = vsel %vm1243, %v1227, %v1259
        %v1276 = vsel %vm1244, %v1228, %v1260
        %v1277 = vsel %vm1245, %v1229, %v1261
        %v1278 = vsel %vm1246, %v1230, %v1262
        %v1279 = vsel %vm1247, %v1231, %v1263
        %v1280 = vsel %vm1248, %v1232, %v1264
        %v1281 = vsel %vm1249, %v1233, %v1265
        %v1282 = vsel %vm1250, %v1234, %v1266
        %v1283 = vsel %vm1251, %v1235, %v1267
        %v1284 = vsel %vm1252, %v1236, %v1268
        %v1285 = vsel %vm1253, %v1237, %v1269
        %v1286 = vld [vmem:[%s8] sm:$0xff]
        %v1287 = vld [vmem:[%s8 + $0x8] sm:$0xff]
        %v1288 = vld [vmem:[%s8 + $0x10] sm:$0xff]
        %v1289 = vld [vmem:[%s8 + $0x18] sm:$0xff]
        %v1290 = vld [vmem:[%s9] sm:$0x1]
        %v1292 = vperm.slane %v1290, 0
        %v1295 = vsel %vm453, %v1270, 0
        %v1298 = vsel %vm453, %v1271, 0
        %v1301 = vsel %vm453, %v1272, 0
        %v1304 = vsel %vm453, %v1273, 0
        %v1307 = vsel %vm453, %v1274, 0
        %v1310 = vsel %vm453, %v1275, 0
        %v1313 = vsel %vm453, %v1276, 0
        %v1316 = vsel %vm453, %v1277, 0
        %v1319 = vsel %vm453, %v1278, 0
        %v1322 = vsel %vm453, %v1279, 0
        %v1325 = vsel %vm453, %v1280, 0
        %v1328 = vsel %vm453, %v1281, 0
        %v1331 = vsel %vm453, %v1282, 0
        %v1334 = vsel %vm453, %v1283, 0
        %v1337 = vsel %vm453, %v1284, 0
        %v1340 = vsel %vm453, %v1285, 0
        %1342 = vmatpush.msra.mxu0 0.0
        %1343 = vmatpush.msra.mxu0 0.0
        %1344 = vmatpush.msra.mxu0 0.0
        %1345 = vmatpush.msra.mxu0 0.0
        %1346 = vmatpush.msra.mxu0 0.0
        %1347 = vmatpush.msra.mxu0 0.0
        %1348 = vmatpush.msra.mxu0 0.0
        %1349 = vmatpush.msra.mxu0 0.0
        %1350 = vmatpush.msra.mxu0 0.0
        %1351 = vmatpush.msra.mxu0 0.0
        %1352 = vmatpush.msra.mxu0 0.0
        %1353 = vmatpush.msra.mxu0 0.0
        %1354 = vmatpush.msra.mxu0 %v1289
        %1355 = vmatpush.msra.mxu0 %v1288
        %1356 = vmatpush.msra.mxu0 %v1287
        %1357 = vmatpush.msra.mxu0 %v1286
        %1358 = vmatmul.f32.gmra.mxu0 %v1295
        %v1359 = vpop.f32.mrf.mxu0
        %v1360 = vadd.f32 %v1292, %v1359
        %1361 = vmatmul.f32.gmra.mxu0 %v1298
        %v1362 = vpop.f32.mrf.mxu0
        %v1363 = vadd.f32 %v1292, %v1362
        %1364 = vmatmul.f32.gmra.mxu0 %v1301
        %v1365 = vpop.f32.mrf.mxu0
        %v1366 = vadd.f32 %v1292, %v1365
        %1367 = vmatmul.f32.gmra.mxu0 %v1304
        %v1368 = vpop.f32.mrf.mxu0
        %v1369 = vadd.f32 %v1292, %v1368
        %1370 = vmatmul.f32.gmra.mxu0 %v1307
        %v1371 = vpop.f32.mrf.mxu0
        %v1372 = vadd.f32 %v1292, %v1371
        %1373 = vmatmul.f32.gmra.mxu0 %v1310
        %v1374 = vpop.f32.mrf.mxu0
        %v1375 = vadd.f32 %v1292, %v1374
        %1376 = vmatmul.f32.gmra.mxu0 %v1313
        %v1377 = vpop.f32.mrf.mxu0
        %v1378 = vadd.f32 %v1292, %v1377
        %1379 = vmatmul.f32.gmra.mxu0 %v1316
        %v1380 = vpop.f32.mrf.mxu0
        %v1381 = vadd.f32 %v1292, %v1380
        %1382 = vmatmul.f32.gmra.mxu0 %v1319
        %v1383 = vpop.f32.mrf.mxu0
        %v1384 = vadd.f32 %v1292, %v1383
        %1385 = vmatmul.f32.gmra.mxu0 %v1322
        %v1386 = vpop.f32.mrf.mxu0
        %v1387 = vadd.f32 %v1292, %v1386
        %1388 = vmatmul.f32.gmra.mxu0 %v1325
        %v1389 = vpop.f32.mrf.mxu0
        %v1390 = vadd.f32 %v1292, %v1389
        %1391 = vmatmul.f32.gmra.mxu0 %v1328
        %v1392 = vpop.f32.mrf.mxu0
        %v1393 = vadd.f32 %v1292, %v1392
        %1394 = vmatmul.f32.gmra.mxu0 %v1331
        %v1395 = vpop.f32.mrf.mxu0
        %v1396 = vadd.f32 %v1292, %v1395
        %1397 = vmatmul.f32.gmra.mxu0 %v1334
        %v1398 = vpop.f32.mrf.mxu0
        %v1399 = vadd.f32 %v1292, %v1398
        %1400 = vmatmul.f32.gmra.mxu0 %v1337
        %v1401 = vpop.f32.mrf.mxu0
        %v1402 = vadd.f32 %v1292, %v1401
        %1403 = vmatmul.f32.gmra.mxu0 %v1340
        %v1404 = vpop.f32.mrf.mxu0
        %v1405 = vadd.f32 %v1292, %v1404
        %1406 = vdwg.mxu0
        %v1407 = vld [vmem:[%s10] sm:$0xff]
        %v1408 = vld [vmem:[%s10 + $0x8] sm:$0xff]
        %v1409 = vld [vmem:[%s10 + $0x10] sm:$0xff]
        %v1410 = vld [vmem:[%s10 + $0x18] sm:$0xff]
        %v1411 = vld [vmem:[%s10 + $0x20] sm:$0xff]
        %v1412 = vld [vmem:[%s10 + $0x28] sm:$0xff]
        %v1413 = vld [vmem:[%s10 + $0x30] sm:$0xff]
        %v1414 = vld [vmem:[%s10 + $0x38] sm:$0xff]
        %v1415 = vld [vmem:[%s10 + $0x40] sm:$0xff]
        %v1416 = vld [vmem:[%s10 + $0x48] sm:$0xff]
        %v1417 = vld [vmem:[%s10 + $0x50] sm:$0xff]
        %v1418 = vld [vmem:[%s10 + $0x58] sm:$0xff]
        %v1419 = vld [vmem:[%s10 + $0x60] sm:$0xff]
        %v1420 = vld [vmem:[%s10 + $0x68] sm:$0xff]
        %v1421 = vld [vmem:[%s10 + $0x70] sm:$0xff]
        %v1422 = vld [vmem:[%s10 + $0x78] sm:$0xff]
        %v1423 = vld [vmem:[%s10 + $0x80] sm:$0xff]
        %v1424 = vld [vmem:[%s10 + $0x88] sm:$0xff]
        %v1425 = vld [vmem:[%s10 + $0x90] sm:$0xff]
        %v1426 = vld [vmem:[%s10 + $0x98] sm:$0xff]
        %v1427 = vld [vmem:[%s10 + $0xa0] sm:$0xff]
        %v1428 = vld [vmem:[%s10 + $0xa8] sm:$0xff]
        %v1429 = vld [vmem:[%s10 + $0xb0] sm:$0xff]
        %v1430 = vld [vmem:[%s10 + $0xb8] sm:$0xff]
        %v1431 = vld [vmem:[%s10 + $0xc0] sm:$0xff]
        %v1432 = vld [vmem:[%s10 + $0xc8] sm:$0xff]
        %v1433 = vld [vmem:[%s10 + $0xd0] sm:$0xff]
        %v1434 = vld [vmem:[%s10 + $0xd8] sm:$0xff]
        %v1435 = vld [vmem:[%s10 + $0xe0] sm:$0xff]
        %v1436 = vld [vmem:[%s10 + $0xe8] sm:$0xff]
        %v1437 = vld [vmem:[%s10 + $0xf0] sm:$0xff]
        %v1438 = vld [vmem:[%s10 + $0xf8] sm:$0xff]
        %v1440 = vsel %vm453, %v885, 0
        %v1443 = vsel %vm453, %v886, 0
        %v1446 = vsel %vm453, %v887, 0
        %v1449 = vsel %vm453, %v888, 0
        %v1452 = vsel %vm453, %v889, 0
        %v1455 = vsel %vm453, %v890, 0
        %v1458 = vsel %vm453, %v891, 0
        %v1461 = vsel %vm453, %v892, 0
        %v1464 = vsel %vm453, %v893, 0
        %v1467 = vsel %vm453, %v894, 0
        %v1470 = vsel %vm453, %v895, 0
        %v1473 = vsel %vm453, %v896, 0
        %v1476 = vsel %vm453, %v897, 0
        %v1479 = vsel %vm453, %v898, 0
        %v1482 = vsel %vm453, %v899, 0
        %v1485 = vsel %vm453, %v900, 0
        %1487 = vmatpush.msra.mxu0 0.0
        %1488 = vmatpush.msra.mxu0 0.0
        %1489 = vmatpush.msra.mxu0 0.0
        %1490 = vmatpush.msra.mxu0 0.0
        %1491 = vmatpush.msra.mxu0 0.0
        %1492 = vmatpush.msra.mxu0 0.0
        %1493 = vmatpush.msra.mxu0 0.0
        %1494 = vmatpush.msra.mxu0 0.0
        %1495 = vmatpush.msra.mxu0 0.0
        %1496 = vmatpush.msra.mxu0 0.0
        %1497 = vmatpush.msra.mxu0 0.0
        %1498 = vmatpush.msra.mxu0 0.0
        %1499 = vmatpush.msra.mxu0 %v1431
        %1500 = vmatpush.msra.mxu0 %v1423
        %1501 = vmatpush.msra.mxu0 %v1415
        %1502 = vmatpush.msra.mxu0 %v1407
        %1503 = vmatmul.f32.gmra.mxu0 %v1440
        %v1504 = vpop.f32.mrf.mxu0
        %v1505 = vadd.f32 0.0, %v1504
        %1506 = vmatmul.f32.gmra.mxu0 %v1443
        %v1507 = vpop.f32.mrf.mxu0
        %v1508 = vadd.f32 0.0, %v1507
        %1509 = vmatmul.f32.gmra.mxu0 %v1446
        %v1510 = vpop.f32.mrf.mxu0
        %v1511 = vadd.f32 0.0, %v1510
        %1512 = vmatmul.f32.gmra.mxu0 %v1449
        %v1513 = vpop.f32.mrf.mxu0
        %v1514 = vadd.f32 0.0, %v1513
        %1515 = vmatmul.f32.gmra.mxu0 %v1452
        %v1516 = vpop.f32.mrf.mxu0
        %v1517 = vadd.f32 0.0, %v1516
        %1518 = vmatmul.f32.gmra.mxu0 %v1455
        %v1519 = vpop.f32.mrf.mxu0
        %v1520 = vadd.f32 0.0, %v1519
        %1521 = vmatmul.f32.gmra.mxu0 %v1458
        %v1522 = vpop.f32.mrf.mxu0
        %v1523 = vadd.f32 0.0, %v1522
        %1524 = vmatmul.f32.gmra.mxu0 %v1461
        %v1525 = vpop.f32.mrf.mxu0
        %v1526 = vadd.f32 0.0, %v1525
        %1527 = vmatmul.f32.gmra.mxu0 %v1464
        %v1528 = vpop.f32.mrf.mxu0
        %v1529 = vadd.f32 0.0, %v1528
        %1530 = vmatmul.f32.gmra.mxu0 %v1467
        %v1531 = vpop.f32.mrf.mxu0
        %v1532 = vadd.f32 0.0, %v1531
        %1533 = vmatmul.f32.gmra.mxu0 %v1470
        %v1534 = vpop.f32.mrf.mxu0
        %v1535 = vadd.f32 0.0, %v1534
        %1536 = vmatmul.f32.gmra.mxu0 %v1473
        %v1537 = vpop.f32.mrf.mxu0
        %v1538 = vadd.f32 0.0, %v1537
        %1539 = vmatmul.f32.gmra.mxu0 %v1476
        %v1540 = vpop.f32.mrf.mxu0
        %v1541 = vadd.f32 0.0, %v1540
        %1542 = vmatmul.f32.gmra.mxu0 %v1479
        %v1543 = vpop.f32.mrf.mxu0
        %v1544 = vadd.f32 0.0, %v1543
        %1545 = vmatmul.f32.gmra.mxu0 %v1482
        %v1546 = vpop.f32.mrf.mxu0
        %v1547 = vadd.f32 0.0, %v1546
        %1548 = vmatmul.f32.gmra.mxu0 %v1485
        %v1549 = vpop.f32.mrf.mxu0
        %v1550 = vadd.f32 0.0, %v1549
        %1551 = vdwg.mxu0
        %1552 = vmatpush.msra.mxu0 0.0
        %1553 = vmatpush.msra.mxu0 0.0
        %1554 = vmatpush.msra.mxu0 0.0
        %1555 = vmatpush.msra.mxu0 0.0
        %1556 = vmatpush.msra.mxu0 0.0
        %1557 = vmatpush.msra.mxu0 0.0
        %1558 = vmatpush.msra.mxu0 0.0
        %1559 = vmatpush.msra.mxu0 0.0
        %1560 = vmatpush.msra.mxu0 0.0
        %1561 = vmatpush.msra.mxu0 0.0
        %1562 = vmatpush.msra.mxu0 0.0
        %1563 = vmatpush.msra.mxu0 0.0
        %1564 = vmatpush.msra.mxu0 %v1432
        %1565 = vmatpush.msra.mxu0 %v1424
        %1566 = vmatpush.msra.mxu0 %v1416
        %1567 = vmatpush.msra.mxu0 %v1408
        %1568 = vmatmul.f32.gmra.mxu0 %v1440
        %v1569 = vpop.f32.mrf.mxu0
        %v1570 = vadd.f32 0.0, %v1569
        %1571 = vmatmul.f32.gmra.mxu0 %v1443
        %v1572 = vpop.f32.mrf.mxu0
        %v1573 = vadd.f32 0.0, %v1572
        %1574 = vmatmul.f32.gmra.mxu0 %v1446
        %v1575 = vpop.f32.mrf.mxu0
        %v1576 = vadd.f32 0.0, %v1575
        %1577 = vmatmul.f32.gmra.mxu0 %v1449
        %v1578 = vpop.f32.mrf.mxu0
        %v1579 = vadd.f32 0.0, %v1578
        %1580 = vmatmul.f32.gmra.mxu0 %v1452
        %v1581 = vpop.f32.mrf.mxu0
        %v1582 = vadd.f32 0.0, %v1581
        %1583 = vmatmul.f32.gmra.mxu0 %v1455
        %v1584 = vpop.f32.mrf.mxu0
        %v1585 = vadd.f32 0.0, %v1584
        %1586 = vmatmul.f32.gmra.mxu0 %v1458
        %v1587 = vpop.f32.mrf.mxu0
        %v1588 = vadd.f32 0.0, %v1587
        %1589 = vmatmul.f32.gmra.mxu0 %v1461
        %v1590 = vpop.f32.mrf.mxu0
        %v1591 = vadd.f32 0.0, %v1590
        %1592 = vmatmul.f32.gmra.mxu0 %v1464
        %v1593 = vpop.f32.mrf.mxu0
        %v1594 = vadd.f32 0.0, %v1593
        %1595 = vmatmul.f32.gmra.mxu0 %v1467
        %v1596 = vpop.f32.mrf.mxu0
        %v1597 = vadd.f32 0.0, %v1596
        %1598 = vmatmul.f32.gmra.mxu0 %v1470
        %v1599 = vpop.f32.mrf.mxu0
        %v1600 = vadd.f32 0.0, %v1599
        %1601 = vmatmul.f32.gmra.mxu0 %v1473
        %v1602 = vpop.f32.mrf.mxu0
        %v1603 = vadd.f32 0.0, %v1602
        %1604 = vmatmul.f32.gmra.mxu0 %v1476
        %v1605 = vpop.f32.mrf.mxu0
        %v1606 = vadd.f32 0.0, %v1605
        %1607 = vmatmul.f32.gmra.mxu0 %v1479
        %v1608 = vpop.f32.mrf.mxu0
        %v1609 = vadd.f32 0.0, %v1608
        %1610 = vmatmul.f32.gmra.mxu0 %v1482
        %v1611 = vpop.f32.mrf.mxu0
        %v1612 = vadd.f32 0.0, %v1611
        %1613 = vmatmul.f32.gmra.mxu0 %v1485
        %v1614 = vpop.f32.mrf.mxu0
        %v1615 = vadd.f32 0.0, %v1614
        %1616 = vdwg.mxu0
        %1617 = vmatpush.msra.mxu0 0.0
        %1618 = vmatpush.msra.mxu0 0.0
        %1619 = vmatpush.msra.mxu0 0.0
        %1620 = vmatpush.msra.mxu0 0.0
        %1621 = vmatpush.msra.mxu0 0.0
        %1622 = vmatpush.msra.mxu0 0.0
        %1623 = vmatpush.msra.mxu0 0.0
        %1624 = vmatpush.msra.mxu0 0.0
        %1625 = vmatpush.msra.mxu0 0.0
        %1626 = vmatpush.msra.mxu0 0.0
        %1627 = vmatpush.msra.mxu0 0.0
        %1628 = vmatpush.msra.mxu0 0.0
        %1629 = vmatpush.msra.mxu0 %v1433
        %1630 = vmatpush.msra.mxu0 %v1425
        %1631 = vmatpush.msra.mxu0 %v1417
        %1632 = vmatpush.msra.mxu0 %v1409
        %1633 = vmatmul.f32.gmra.mxu0 %v1440
        %v1634 = vpop.f32.mrf.mxu0
        %v1635 = vadd.f32 0.0, %v1634
        %1636 = vmatmul.f32.gmra.mxu0 %v1443
        %v1637 = vpop.f32.mrf.mxu0
        %v1638 = vadd.f32 0.0, %v1637
        %1639 = vmatmul.f32.gmra.mxu0 %v1446
        %v1640 = vpop.f32.mrf.mxu0
        %v1641 = vadd.f32 0.0, %v1640
        %1642 = vmatmul.f32.gmra.mxu0 %v1449
        %v1643 = vpop.f32.mrf.mxu0
        %v1644 = vadd.f32 0.0, %v1643
        %1645 = vmatmul.f32.gmra.mxu0 %v1452
        %v1646 = vpop.f32.mrf.mxu0
        %v1647 = vadd.f32 0.0, %v1646
        %1648 = vmatmul.f32.gmra.mxu0 %v1455
        %v1649 = vpop.f32.mrf.mxu0
        %v1650 = vadd.f32 0.0, %v1649
        %1651 = vmatmul.f32.gmra.mxu0 %v1458
        %v1652 = vpop.f32.mrf.mxu0
        %v1653 = vadd.f32 0.0, %v1652
        %1654 = vmatmul.f32.gmra.mxu0 %v1461
        %v1655 = vpop.f32.mrf.mxu0
        %v1656 = vadd.f32 0.0, %v1655
        %1657 = vmatmul.f32.gmra.mxu0 %v1464
        %v1658 = vpop.f32.mrf.mxu0
        %v1659 = vadd.f32 0.0, %v1658
        %1660 = vmatmul.f32.gmra.mxu0 %v1467
        %v1661 = vpop.f32.mrf.mxu0
        %v1662 = vadd.f32 0.0, %v1661
        %1663 = vmatmul.f32.gmra.mxu0 %v1470
        %v1664 = vpop.f32.mrf.mxu0
        %v1665 = vadd.f32 0.0, %v1664
        %1666 = vmatmul.f32.gmra.mxu0 %v1473
        %v1667 = vpop.f32.mrf.mxu0
        %v1668 = vadd.f32 0.0, %v1667
        %1669 = vmatmul.f32.gmra.mxu0 %v1476
        %v1670 = vpop.f32.mrf.mxu0
        %v1671 = vadd.f32 0.0, %v1670
        %1672 = vmatmul.f32.gmra.mxu0 %v1479
        %v1673 = vpop.f32.mrf.mxu0
        %v1674 = vadd.f32 0.0, %v1673
        %1675 = vmatmul.f32.gmra.mxu0 %v1482
        %v1676 = vpop.f32.mrf.mxu0
        %v1677 = vadd.f32 0.0, %v1676
        %1678 = vmatmul.f32.gmra.mxu0 %v1485
        %v1679 = vpop.f32.mrf.mxu0
        %v1680 = vadd.f32 0.0, %v1679
        %1681 = vdwg.mxu0
        %1682 = vmatpush.msra.mxu0 0.0
        %1683 = vmatpush.msra.mxu0 0.0
        %1684 = vmatpush.msra.mxu0 0.0
        %1685 = vmatpush.msra.mxu0 0.0
        %1686 = vmatpush.msra.mxu0 0.0
        %1687 = vmatpush.msra.mxu0 0.0
        %1688 = vmatpush.msra.mxu0 0.0
        %1689 = vmatpush.msra.mxu0 0.0
        %1690 = vmatpush.msra.mxu0 0.0
        %1691 = vmatpush.msra.mxu0 0.0
        %1692 = vmatpush.msra.mxu0 0.0
        %1693 = vmatpush.msra.mxu0 0.0
        %1694 = vmatpush.msra.mxu0 %v1434
        %1695 = vmatpush.msra.mxu0 %v1426
        %1696 = vmatpush.msra.mxu0 %v1418
        %1697 = vmatpush.msra.mxu0 %v1410
        %1698 = vmatmul.f32.gmra.mxu0 %v1440
        %v1699 = vpop.f32.mrf.mxu0
        %v1700 = vadd.f32 0.0, %v1699
        %1701 = vmatmul.f32.gmra.mxu0 %v1443
        %v1702 = vpop.f32.mrf.mxu0
        %v1703 = vadd.f32 0.0, %v1702
        %1704 = vmatmul.f32.gmra.mxu0 %v1446
        %v1705 = vpop.f32.mrf.mxu0
        %v1706 = vadd.f32 0.0, %v1705
        %1707 = vmatmul.f32.gmra.mxu0 %v1449
        %v1708 = vpop.f32.mrf.mxu0
        %v1709 = vadd.f32 0.0, %v1708
        %1710 = vmatmul.f32.gmra.mxu0 %v1452
        %v1711 = vpop.f32.mrf.mxu0
        %v1712 = vadd.f32 0.0, %v1711
        %1713 = vmatmul.f32.gmra.mxu0 %v1455
        %v1714 = vpop.f32.mrf.mxu0
        %v1715 = vadd.f32 0.0, %v1714
        %1716 = vmatmul.f32.gmra.mxu0 %v1458
        %v1717 = vpop.f32.mrf.mxu0
        %v1718 = vadd.f32 0.0, %v1717
        %1719 = vmatmul.f32.gmra.mxu0 %v1461
        %v1720 = vpop.f32.mrf.mxu0
        %v1721 = vadd.f32 0.0, %v1720
        %1722 = vmatmul.f32.gmra.mxu0 %v1464
        %v1723 = vpop.f32.mrf.mxu0
        %v1724 = vadd.f32 0.0, %v1723
        %1725 = vmatmul.f32.gmra.mxu0 %v1467
        %v1726 = vpop.f32.mrf.mxu0
        %v1727 = vadd.f32 0.0, %v1726
        %1728 = vmatmul.f32.gmra.mxu0 %v1470
        %v1729 = vpop.f32.mrf.mxu0
        %v1730 = vadd.f32 0.0, %v1729
        %1731 = vmatmul.f32.gmra.mxu0 %v1473
        %v1732 = vpop.f32.mrf.mxu0
        %v1733 = vadd.f32 0.0, %v1732
        %1734 = vmatmul.f32.gmra.mxu0 %v1476
        %v1735 = vpop.f32.mrf.mxu0
        %v1736 = vadd.f32 0.0, %v1735
        %1737 = vmatmul.f32.gmra.mxu0 %v1479
        %v1738 = vpop.f32.mrf.mxu0
        %v1739 = vadd.f32 0.0, %v1738
        %1740 = vmatmul.f32.gmra.mxu0 %v1482
        %v1741 = vpop.f32.mrf.mxu0
        %v1742 = vadd.f32 0.0, %v1741
        %1743 = vmatmul.f32.gmra.mxu0 %v1485
        %v1744 = vpop.f32.mrf.mxu0
        %v1745 = vadd.f32 0.0, %v1744
        %1746 = vdwg.mxu0
        %1747 = vmatpush.msra.mxu0 0.0
        %1748 = vmatpush.msra.mxu0 0.0
        %1749 = vmatpush.msra.mxu0 0.0
        %1750 = vmatpush.msra.mxu0 0.0
        %1751 = vmatpush.msra.mxu0 0.0
        %1752 = vmatpush.msra.mxu0 0.0
        %1753 = vmatpush.msra.mxu0 0.0
        %1754 = vmatpush.msra.mxu0 0.0
        %1755 = vmatpush.msra.mxu0 0.0
        %1756 = vmatpush.msra.mxu0 0.0
        %1757 = vmatpush.msra.mxu0 0.0
        %1758 = vmatpush.msra.mxu0 0.0
        %1759 = vmatpush.msra.mxu0 %v1435
        %1760 = vmatpush.msra.mxu0 %v1427
        %1761 = vmatpush.msra.mxu0 %v1419
        %1762 = vmatpush.msra.mxu0 %v1411
        %1763 = vmatmul.f32.gmra.mxu0 %v1440
        %v1764 = vpop.f32.mrf.mxu0
        %v1765 = vadd.f32 0.0, %v1764
        %1766 = vmatmul.f32.gmra.mxu0 %v1443
        %v1767 = vpop.f32.mrf.mxu0
        %v1768 = vadd.f32 0.0, %v1767
        %1769 = vmatmul.f32.gmra.mxu0 %v1446
        %v1770 = vpop.f32.mrf.mxu0
        %v1771 = vadd.f32 0.0, %v1770
        %1772 = vmatmul.f32.gmra.mxu0 %v1449
        %v1773 = vpop.f32.mrf.mxu0
        %v1774 = vadd.f32 0.0, %v1773
        %1775 = vmatmul.f32.gmra.mxu0 %v1452
        %v1776 = vpop.f32.mrf.mxu0
        %v1777 = vadd.f32 0.0, %v1776
        %1778 = vmatmul.f32.gmra.mxu0 %v1455
        %v1779 = vpop.f32.mrf.mxu0
        %v1780 = vadd.f32 0.0, %v1779
        %1781 = vmatmul.f32.gmra.mxu0 %v1458
        %v1782 = vpop.f32.mrf.mxu0
        %v1783 = vadd.f32 0.0, %v1782
        %1784 = vmatmul.f32.gmra.mxu0 %v1461
        %v1785 = vpop.f32.mrf.mxu0
        %v1786 = vadd.f32 0.0, %v1785
        %1787 = vmatmul.f32.gmra.mxu0 %v1464
        %v1788 = vpop.f32.mrf.mxu0
        %v1789 = vadd.f32 0.0, %v1788
        %1790 = vmatmul.f32.gmra.mxu0 %v1467
        %v1791 = vpop.f32.mrf.mxu0
        %v1792 = vadd.f32 0.0, %v1791
        %1793 = vmatmul.f32.gmra.mxu0 %v1470
        %v1794 = vpop.f32.mrf.mxu0
        %v1795 = vadd.f32 0.0, %v1794
        %1796 = vmatmul.f32.gmra.mxu0 %v1473
        %v1797 = vpop.f32.mrf.mxu0
        %v1798 = vadd.f32 0.0, %v1797
        %1799 = vmatmul.f32.gmra.mxu0 %v1476
        %v1800 = vpop.f32.mrf.mxu0
        %v1801 = vadd.f32 0.0, %v1800
        %1802 = vmatmul.f32.gmra.mxu0 %v1479
        %v1803 = vpop.f32.mrf.mxu0
        %v1804 = vadd.f32 0.0, %v1803
        %1805 = vmatmul.f32.gmra.mxu0 %v1482
        %v1806 = vpop.f32.mrf.mxu0
        %v1807 = vadd.f32 0.0, %v1806
        %1808 = vmatmul.f32.gmra.mxu0 %v1485
        %v1809 = vpop.f32.mrf.mxu0
        %v1810 = vadd.f32 0.0, %v1809
        %1811 = vdwg.mxu0
        %1812 = vmatpush.msra.mxu0 0.0
        %1813 = vmatpush.msra.mxu0 0.0
        %1814 = vmatpush.msra.mxu0 0.0
        %1815 = vmatpush.msra.mxu0 0.0
        %1816 = vmatpush.msra.mxu0 0.0
        %1817 = vmatpush.msra.mxu0 0.0
        %1818 = vmatpush.msra.mxu0 0.0
        %1819 = vmatpush.msra.mxu0 0.0
        %1820 = vmatpush.msra.mxu0 0.0
        %1821 = vmatpush.msra.mxu0 0.0
        %1822 = vmatpush.msra.mxu0 0.0
        %1823 = vmatpush.msra.mxu0 0.0
        %1824 = vmatpush.msra.mxu0 %v1436
        %1825 = vmatpush.msra.mxu0 %v1428
        %1826 = vmatpush.msra.mxu0 %v1420
        %1827 = vmatpush.msra.mxu0 %v1412
        %1828 = vmatmul.f32.gmra.mxu0 %v1440
        %v1829 = vpop.f32.mrf.mxu0
        %v1830 = vadd.f32 0.0, %v1829
        %1831 = vmatmul.f32.gmra.mxu0 %v1443
        %v1832 = vpop.f32.mrf.mxu0
        %v1833 = vadd.f32 0.0, %v1832
        %1834 = vmatmul.f32.gmra.mxu0 %v1446
        %v1835 = vpop.f32.mrf.mxu0
        %v1836 = vadd.f32 0.0, %v1835
        %1837 = vmatmul.f32.gmra.mxu0 %v1449
        %v1838 = vpop.f32.mrf.mxu0
        %v1839 = vadd.f32 0.0, %v1838
        %1840 = vmatmul.f32.gmra.mxu0 %v1452
        %v1841 = vpop.f32.mrf.mxu0
        %v1842 = vadd.f32 0.0, %v1841
        %1843 = vmatmul.f32.gmra.mxu0 %v1455
        %v1844 = vpop.f32.mrf.mxu0
        %v1845 = vadd.f32 0.0, %v1844
        %1846 = vmatmul.f32.gmra.mxu0 %v1458
        %v1847 = vpop.f32.mrf.mxu0
        %v1848 = vadd.f32 0.0, %v1847
        %1849 = vmatmul.f32.gmra.mxu0 %v1461
        %v1850 = vpop.f32.mrf.mxu0
        %v1851 = vadd.f32 0.0, %v1850
        %1852 = vmatmul.f32.gmra.mxu0 %v1464
        %v1853 = vpop.f32.mrf.mxu0
        %v1854 = vadd.f32 0.0, %v1853
        %1855 = vmatmul.f32.gmra.mxu0 %v1467
        %v1856 = vpop.f32.mrf.mxu0
        %v1857 = vadd.f32 0.0, %v1856
        %1858 = vmatmul.f32.gmra.mxu0 %v1470
        %v1859 = vpop.f32.mrf.mxu0
        %v1860 = vadd.f32 0.0, %v1859
        %1861 = vmatmul.f32.gmra.mxu0 %v1473
        %v1862 = vpop.f32.mrf.mxu0
        %v1863 = vadd.f32 0.0, %v1862
        %1864 = vmatmul.f32.gmra.mxu0 %v1476
        %v1865 = vpop.f32.mrf.mxu0
        %v1866 = vadd.f32 0.0, %v1865
        %1867 = vmatmul.f32.gmra.mxu0 %v1479
        %v1868 = vpop.f32.mrf.mxu0
        %v1869 = vadd.f32 0.0, %v1868
        %1870 = vmatmul.f32.gmra.mxu0 %v1482
        %v1871 = vpop.f32.mrf.mxu0
        %v1872 = vadd.f32 0.0, %v1871
        %1873 = vmatmul.f32.gmra.mxu0 %v1485
        %v1874 = vpop.f32.mrf.mxu0
        %v1875 = vadd.f32 0.0, %v1874
        %1876 = vdwg.mxu0
        %1877 = vmatpush.msra.mxu0 0.0
        %1878 = vmatpush.msra.mxu0 0.0
        %1879 = vmatpush.msra.mxu0 0.0
        %1880 = vmatpush.msra.mxu0 0.0
        %1881 = vmatpush.msra.mxu0 0.0
        %1882 = vmatpush.msra.mxu0 0.0
        %1883 = vmatpush.msra.mxu0 0.0
        %1884 = vmatpush.msra.mxu0 0.0
        %1885 = vmatpush.msra.mxu0 0.0
        %1886 = vmatpush.msra.mxu0 0.0
        %1887 = vmatpush.msra.mxu0 0.0
        %1888 = vmatpush.msra.mxu0 0.0
        %1889 = vmatpush.msra.mxu0 %v1437
        %1890 = vmatpush.msra.mxu0 %v1429
        %1891 = vmatpush.msra.mxu0 %v1421
        %1892 = vmatpush.msra.mxu0 %v1413
        %1893 = vmatmul.f32.gmra.mxu0 %v1440
        %v1894 = vpop.f32.mrf.mxu0
        %v1895 = vadd.f32 0.0, %v1894
        %1896 = vmatmul.f32.gmra.mxu0 %v1443
        %v1897 = vpop.f32.mrf.mxu0
        %v1898 = vadd.f32 0.0, %v1897
        %1899 = vmatmul.f32.gmra.mxu0 %v1446
        %v1900 = vpop.f32.mrf.mxu0
        %v1901 = vadd.f32 0.0, %v1900
        %1902 = vmatmul.f32.gmra.mxu0 %v1449
        %v1903 = vpop.f32.mrf.mxu0
        %v1904 = vadd.f32 0.0, %v1903
        %1905 = vmatmul.f32.gmra.mxu0 %v1452
        %v1906 = vpop.f32.mrf.mxu0
        %v1907 = vadd.f32 0.0, %v1906
        %1908 = vmatmul.f32.gmra.mxu0 %v1455
        %v1909 = vpop.f32.mrf.mxu0
        %v1910 = vadd.f32 0.0, %v1909
        %1911 = vmatmul.f32.gmra.mxu0 %v1458
        %v1912 = vpop.f32.mrf.mxu0
        %v1913 = vadd.f32 0.0, %v1912
        %1914 = vmatmul.f32.gmra.mxu0 %v1461
        %v1915 = vpop.f32.mrf.mxu0
        %v1916 = vadd.f32 0.0, %v1915
        %1917 = vmatmul.f32.gmra.mxu0 %v1464
        %v1918 = vpop.f32.mrf.mxu0
        %v1919 = vadd.f32 0.0, %v1918
        %1920 = vmatmul.f32.gmra.mxu0 %v1467
        %v1921 = vpop.f32.mrf.mxu0
        %v1922 = vadd.f32 0.0, %v1921
        %1923 = vmatmul.f32.gmra.mxu0 %v1470
        %v1924 = vpop.f32.mrf.mxu0
        %v1925 = vadd.f32 0.0, %v1924
        %1926 = vmatmul.f32.gmra.mxu0 %v1473
        %v1927 = vpop.f32.mrf.mxu0
        %v1928 = vadd.f32 0.0, %v1927
        %1929 = vmatmul.f32.gmra.mxu0 %v1476
        %v1930 = vpop.f32.mrf.mxu0
        %v1931 = vadd.f32 0.0, %v1930
        %1932 = vmatmul.f32.gmra.mxu0 %v1479
        %v1933 = vpop.f32.mrf.mxu0
        %v1934 = vadd.f32 0.0, %v1933
        %1935 = vmatmul.f32.gmra.mxu0 %v1482
        %v1936 = vpop.f32.mrf.mxu0
        %v1937 = vadd.f32 0.0, %v1936
        %1938 = vmatmul.f32.gmra.mxu0 %v1485
        %v1939 = vpop.f32.mrf.mxu0
        %v1940 = vadd.f32 0.0, %v1939
        %1941 = vdwg.mxu0
        %1942 = vmatpush.msra.mxu0 0.0
        %1943 = vmatpush.msra.mxu0 0.0
        %1944 = vmatpush.msra.mxu0 0.0
        %1945 = vmatpush.msra.mxu0 0.0
        %1946 = vmatpush.msra.mxu0 0.0
        %1947 = vmatpush.msra.mxu0 0.0
        %1948 = vmatpush.msra.mxu0 0.0
        %1949 = vmatpush.msra.mxu0 0.0
        %1950 = vmatpush.msra.mxu0 0.0
        %1951 = vmatpush.msra.mxu0 0.0
        %1952 = vmatpush.msra.mxu0 0.0
        %1953 = vmatpush.msra.mxu0 0.0
        %1954 = vmatpush.msra.mxu0 %v1438
        %1955 = vmatpush.msra.mxu0 %v1430
        %1956 = vmatpush.msra.mxu0 %v1422
        %1957 = vmatpush.msra.mxu0 %v1414
        %1958 = vmatmul.f32.gmra.mxu0 %v1440
        %v1959 = vpop.f32.mrf.mxu0
        %v1960 = vadd.f32 0.0, %v1959
        %1961 = vmatmul.f32.gmra.mxu0 %v1443
        %v1962 = vpop.f32.mrf.mxu0
        %v1963 = vadd.f32 0.0, %v1962
        %1964 = vmatmul.f32.gmra.mxu0 %v1446
        %v1965 = vpop.f32.mrf.mxu0
        %v1966 = vadd.f32 0.0, %v1965
        %1967 = vmatmul.f32.gmra.mxu0 %v1449
        %v1968 = vpop.f32.mrf.mxu0
        %v1969 = vadd.f32 0.0, %v1968
        %1970 = vmatmul.f32.gmra.mxu0 %v1452
        %v1971 = vpop.f32.mrf.mxu0
        %v1972 = vadd.f32 0.0, %v1971
        %1973 = vmatmul.f32.gmra.mxu0 %v1455
        %v1974 = vpop.f32.mrf.mxu0
        %v1975 = vadd.f32 0.0, %v1974
        %1976 = vmatmul.f32.gmra.mxu0 %v1458
        %v1977 = vpop.f32.mrf.mxu0
        %v1978 = vadd.f32 0.0, %v1977
        %1979 = vmatmul.f32.gmra.mxu0 %v1461
        %v1980 = vpop.f32.mrf.mxu0
        %v1981 = vadd.f32 0.0, %v1980
        %1982 = vmatmul.f32.gmra.mxu0 %v1464
        %v1983 = vpop.f32.mrf.mxu0
        %v1984 = vadd.f32 0.0, %v1983
        %1985 = vmatmul.f32.gmra.mxu0 %v1467
        %v1986 = vpop.f32.mrf.mxu0
        %v1987 = vadd.f32 0.0, %v1986
        %1988 = vmatmul.f32.gmra.mxu0 %v1470
        %v1989 = vpop.f32.mrf.mxu0
        %v1990 = vadd.f32 0.0, %v1989
        %1991 = vmatmul.f32.gmra.mxu0 %v1473
        %v1992 = vpop.f32.mrf.mxu0
        %v1993 = vadd.f32 0.0, %v1992
        %1994 = vmatmul.f32.gmra.mxu0 %v1476
        %v1995 = vpop.f32.mrf.mxu0
        %v1996 = vadd.f32 0.0, %v1995
        %1997 = vmatmul.f32.gmra.mxu0 %v1479
        %v1998 = vpop.f32.mrf.mxu0
        %v1999 = vadd.f32 0.0, %v1998
        %2000 = vmatmul.f32.gmra.mxu0 %v1482
        %v2001 = vpop.f32.mrf.mxu0
        %v2002 = vadd.f32 0.0, %v2001
        %2003 = vmatmul.f32.gmra.mxu0 %v1485
        %v2004 = vpop.f32.mrf.mxu0
        %v2005 = vadd.f32 0.0, %v2004
        %2006 = vdwg.mxu0
        %v2007 = vld [vmem:[%s11] sm:$0xff]
        %2009 = vset.pattern.permute.xlu0 0
        %2010 = vperm.xlu0 %2009, %v1360
        %v2011 = vpop.permute.xlu0 %2010
        %2014 = vset.pattern.permute.xlu0 0
        %2015 = vperm.xlu0 %2014, %v1363
        %v2016 = vpop.permute.xlu0 %2015
        %2019 = vset.pattern.permute.xlu0 0
        %2020 = vperm.xlu0 %2019, %v1366
        %v2021 = vpop.permute.xlu0 %2020
        %2024 = vset.pattern.permute.xlu0 0
        %2025 = vperm.xlu0 %2024, %v1369
        %v2026 = vpop.permute.xlu0 %2025
        %2029 = vset.pattern.permute.xlu0 0
        %2030 = vperm.xlu0 %2029, %v1372
        %v2031 = vpop.permute.xlu0 %2030
        %2034 = vset.pattern.permute.xlu0 0
        %2035 = vperm.xlu0 %2034, %v1375
        %v2036 = vpop.permute.xlu0 %2035
        %2039 = vset.pattern.permute.xlu0 0
        %2040 = vperm.xlu0 %2039, %v1378
        %v2041 = vpop.permute.xlu0 %2040
        %2044 = vset.pattern.permute.xlu0 0
        %2045 = vperm.xlu0 %2044, %v1381
        %v2046 = vpop.permute.xlu0 %2045
        %2049 = vset.pattern.permute.xlu0 0
        %2050 = vperm.xlu0 %2049, %v1384
        %v2051 = vpop.permute.xlu0 %2050
        %2054 = vset.pattern.permute.xlu0 0
        %2055 = vperm.xlu0 %2054, %v1387
        %v2056 = vpop.permute.xlu0 %2055
        %2059 = vset.pattern.permute.xlu0 0
        %2060 = vperm.xlu0 %2059, %v1390
        %v2061 = vpop.permute.xlu0 %2060
        %2064 = vset.pattern.permute.xlu0 0
        %2065 = vperm.xlu0 %2064, %v1393
        %v2066 = vpop.permute.xlu0 %2065
        %2069 = vset.pattern.permute.xlu0 0
        %2070 = vperm.xlu0 %2069, %v1396
        %v2071 = vpop.permute.xlu0 %2070
        %2074 = vset.pattern.permute.xlu0 0
        %2075 = vperm.xlu0 %2074, %v1399
        %v2076 = vpop.permute.xlu0 %2075
        %2079 = vset.pattern.permute.xlu0 0
        %2080 = vperm.xlu0 %2079, %v1402
        %v2081 = vpop.permute.xlu0 %2080
        %2084 = vset.pattern.permute.xlu0 0
        %2085 = vperm.xlu0 %2084, %v1405
        %v2086 = vpop.permute.xlu0 %2085
        %v2088 = vmul.f32 %v2011, %v1505
        %v2089 = vmul.f32 %v2016, %v1508
        %v2090 = vmul.f32 %v2021, %v1511
        %v2091 = vmul.f32 %v2026, %v1514
        %v2092 = vmul.f32 %v2031, %v1517
        %v2093 = vmul.f32 %v2036, %v1520
        %v2094 = vmul.f32 %v2041, %v1523
        %v2095 = vmul.f32 %v2046, %v1526
        %v2096 = vmul.f32 %v2051, %v1529
        %v2097 = vmul.f32 %v2056, %v1532
        %v2098 = vmul.f32 %v2061, %v1535
        %v2099 = vmul.f32 %v2066, %v1538
        %v2100 = vmul.f32 %v2071, %v1541
        %v2101 = vmul.f32 %v2076, %v1544
        %v2102 = vmul.f32 %v2081, %v1547
        %v2103 = vmul.f32 %v2086, %v1550
        %vm2104 = vcmask 64512
        %v2105 = vsel %vm2104, %v1360, 0
        %v2107 = vsel %vm2104, %v1363, 0
        %v2109 = vsel %vm2104, %v1366, 0
        %v2111 = vsel %vm2104, %v1369, 0
        %v2113 = vsel %vm2104, %v1372, 0
        %v2115 = vsel %vm2104, %v1375, 0
        %v2117 = vsel %vm2104, %v1378, 0
        %v2119 = vsel %vm2104, %v1381, 0
        %v2121 = vsel %vm2104, %v1384, 0
        %v2123 = vsel %vm2104, %v1387, 0
        %v2125 = vsel %vm2104, %v1390, 0
        %v2127 = vsel %vm2104, %v1393, 0
        %v2129 = vsel %vm2104, %v1396, 0
        %v2131 = vsel %vm2104, %v1399, 0
        %v2133 = vsel %vm2104, %v1402, 0
        %v2135 = vsel %vm2104, %v1405, 0
        %2137 = vmatpush.msra.mxu0 0.0
        %2138 = vmatpush.msra.mxu0 0.0
        %2139 = vmatpush.msra.mxu0 0.0
        %2140 = vmatpush.msra.mxu0 0.0
        %2141 = vmatpush.msra.mxu0 0.0
        %2142 = vmatpush.msra.mxu0 0.0
        %2143 = vmatpush.msra.mxu0 0.0
        %2144 = vmatpush.msra.mxu0 0.0
        %2145 = vmatpush.msra.mxu0 0.0
        %2146 = vmatpush.msra.mxu0 0.0
        %2147 = vmatpush.msra.mxu0 0.0
        %2148 = vmatpush.msra.mxu0 0.0
        %2149 = vmatpush.msra.mxu0 0.0
        %2150 = vmatpush.msra.mxu0 0.0
        %2151 = vmatpush.msra.mxu0 0.0
        %2152 = vmatpush.msra.mxu0 %v2007
        %2153 = vmatmul.f32.gmra.mxu0 %v2105
        %v2154 = vpop.f32.mrf.mxu0
        %v2155 = vadd.f32 %v2088, %v2154
        %2156 = vmatmul.f32.gmra.mxu0 %v2107
        %v2157 = vpop.f32.mrf.mxu0
        %v2158 = vadd.f32 %v2089, %v2157
        %2159 = vmatmul.f32.gmra.mxu0 %v2109
        %v2160 = vpop.f32.mrf.mxu0
        %v2161 = vadd.f32 %v2090, %v2160
        %2162 = vmatmul.f32.gmra.mxu0 %v2111
        %v2163 = vpop.f32.mrf.mxu0
        %v2164 = vadd.f32 %v2091, %v2163
        %2165 = vmatmul.f32.gmra.mxu0 %v2113
        %v2166 = vpop.f32.mrf.mxu0
        %v2167 = vadd.f32 %v2092, %v2166
        %2168 = vmatmul.f32.gmra.mxu0 %v2115
        %v2169 = vpop.f32.mrf.mxu0
        %v2170 = vadd.f32 %v2093, %v2169
        %2171 = vmatmul.f32.gmra.mxu0 %v2117
        %v2172 = vpop.f32.mrf.mxu0
        %v2173 = vadd.f32 %v2094, %v2172
        %2174 = vmatmul.f32.gmra.mxu0 %v2119
        %v2175 = vpop.f32.mrf.mxu0
        %v2176 = vadd.f32 %v2095, %v2175
        %2177 = vmatmul.f32.gmra.mxu0 %v2121
        %v2178 = vpop.f32.mrf.mxu0
        %v2179 = vadd.f32 %v2096, %v2178
        %2180 = vmatmul.f32.gmra.mxu0 %v2123
        %v2181 = vpop.f32.mrf.mxu0
        %v2182 = vadd.f32 %v2097, %v2181
        %2183 = vmatmul.f32.gmra.mxu0 %v2125
        %v2184 = vpop.f32.mrf.mxu0
        %v2185 = vadd.f32 %v2098, %v2184
        %2186 = vmatmul.f32.gmra.mxu0 %v2127
        %v2187 = vpop.f32.mrf.mxu0
        %v2188 = vadd.f32 %v2099, %v2187
        %2189 = vmatmul.f32.gmra.mxu0 %v2129
        %v2190 = vpop.f32.mrf.mxu0
        %v2191 = vadd.f32 %v2100, %v2190
        %2192 = vmatmul.f32.gmra.mxu0 %v2131
        %v2193 = vpop.f32.mrf.mxu0
        %v2194 = vadd.f32 %v2101, %v2193
        %2195 = vmatmul.f32.gmra.mxu0 %v2133
        %v2196 = vpop.f32.mrf.mxu0
        %v2197 = vadd.f32 %v2102, %v2196
        %2198 = vmatmul.f32.gmra.mxu0 %v2135
        %v2199 = vpop.f32.mrf.mxu0
        %v2200 = vadd.f32 %v2103, %v2199
        %2201 = vdwg.mxu0
        %2202 = vset.pattern.permute.xlu0 1
        %2203 = vperm.xlu0 %2202, %v1360
        %v2204 = vpop.permute.xlu0 %2203
        %2206 = vset.pattern.permute.xlu0 1
        %2207 = vperm.xlu0 %2206, %v1363
        %v2208 = vpop.permute.xlu0 %2207
        %2210 = vset.pattern.permute.xlu0 1
        %2211 = vperm.xlu0 %2210, %v1366
        %v2212 = vpop.permute.xlu0 %2211
        %2214 = vset.pattern.permute.xlu0 1
        %2215 = vperm.xlu0 %2214, %v1369
        %v2216 = vpop.permute.xlu0 %2215
        %2218 = vset.pattern.permute.xlu0 1
        %2219 = vperm.xlu0 %2218, %v1372
        %v2220 = vpop.permute.xlu0 %2219
        %2222 = vset.pattern.permute.xlu0 1
        %2223 = vperm.xlu0 %2222, %v1375
        %v2224 = vpop.permute.xlu0 %2223
        %2226 = vset.pattern.permute.xlu0 1
        %2227 = vperm.xlu0 %2226, %v1378
        %v2228 = vpop.permute.xlu0 %2227
        %2230 = vset.pattern.permute.xlu0 1
        %2231 = vperm.xlu0 %2230, %v1381
        %v2232 = vpop.permute.xlu0 %2231
        %2234 = vset.pattern.permute.xlu0 1
        %2235 = vperm.xlu0 %2234, %v1384
        %v2236 = vpop.permute.xlu0 %2235
        %2238 = vset.pattern.permute.xlu0 1
        %2239 = vperm.xlu0 %2238, %v1387
        %v2240 = vpop.permute.xlu0 %2239
        %2242 = vset.pattern.permute.xlu0 1
        %2243 = vperm.xlu0 %2242, %v1390
        %v2244 = vpop.permute.xlu0 %2243
        %2246 = vset.pattern.permute.xlu0 1
        %2247 = vperm.xlu0 %2246, %v1393
        %v2248 = vpop.permute.xlu0 %2247
        %2250 = vset.pattern.permute.xlu0 1
        %2251 = vperm.xlu0 %2250, %v1396
        %v2252 = vpop.permute.xlu0 %2251
        %2254 = vset.pattern.permute.xlu0 1
        %2255 = vperm.xlu0 %2254, %v1399
        %v2256 = vpop.permute.xlu0 %2255
        %2258 = vset.pattern.permute.xlu0 1
        %2259 = vperm.xlu0 %2258, %v1402
        %v2260 = vpop.permute.xlu0 %2259
        %2262 = vset.pattern.permute.xlu0 1
        %2263 = vperm.xlu0 %2262, %v1405
        %v2264 = vpop.permute.xlu0 %2263
        %v2266 = vmul.f32 %v2204, %v1570
        %v2267 = vmul.f32 %v2208, %v1573
        %v2268 = vmul.f32 %v2212, %v1576
        %v2269 = vmul.f32 %v2216, %v1579
        %v2270 = vmul.f32 %v2220, %v1582
        %v2271 = vmul.f32 %v2224, %v1585
        %v2272 = vmul.f32 %v2228, %v1588
        %v2273 = vmul.f32 %v2232, %v1591
        %v2274 = vmul.f32 %v2236, %v1594
        %v2275 = vmul.f32 %v2240, %v1597
        %v2276 = vmul.f32 %v2244, %v1600
        %v2277 = vmul.f32 %v2248, %v1603
        %v2278 = vmul.f32 %v2252, %v1606
        %v2279 = vmul.f32 %v2256, %v1609
        %v2280 = vmul.f32 %v2260, %v1612
        %v2281 = vmul.f32 %v2264, %v1615
        %v2282 = vadd.f32 %v2155, %v2266
        %v2283 = vadd.f32 %v2158, %v2267
        %v2284 = vadd.f32 %v2161, %v2268
        %v2285 = vadd.f32 %v2164, %v2269
        %v2286 = vadd.f32 %v2167, %v2270
        %v2287 = vadd.f32 %v2170, %v2271
        %v2288 = vadd.f32 %v2173, %v2272
        %v2289 = vadd.f32 %v2176, %v2273
        %v2290 = vadd.f32 %v2179, %v2274
        %v2291 = vadd.f32 %v2182, %v2275
        %v2292 = vadd.f32 %v2185, %v2276
        %v2293 = vadd.f32 %v2188, %v2277
        %v2294 = vadd.f32 %v2191, %v2278
        %v2295 = vadd.f32 %v2194, %v2279
        %v2296 = vadd.f32 %v2197, %v2280
        %v2297 = vadd.f32 %v2200, %v2281
        %2298 = vset.pattern.permute.xlu0 2
        %2299 = vperm.xlu0 %2298, %v1360
        %v2300 = vpop.permute.xlu0 %2299
        %2302 = vset.pattern.permute.xlu0 2
        %2303 = vperm.xlu0 %2302, %v1363
        %v2304 = vpop.permute.xlu0 %2303
        %2306 = vset.pattern.permute.xlu0 2
        %2307 = vperm.xlu0 %2306, %v1366
        %v2308 = vpop.permute.xlu0 %2307
        %2310 = vset.pattern.permute.xlu0 2
        %2311 = vperm.xlu0 %2310, %v1369
        %v2312 = vpop.permute.xlu0 %2311
        %2314 = vset.pattern.permute.xlu0 2
        %2315 = vperm.xlu0 %2314, %v1372
        %v2316 = vpop.permute.xlu0 %2315
        %2318 = vset.pattern.permute.xlu0 2
        %2319 = vperm.xlu0 %2318, %v1375
        %v2320 = vpop.permute.xlu0 %2319
        %2322 = vset.pattern.permute.xlu0 2
        %2323 = vperm.xlu0 %2322, %v1378
        %v2324 = vpop.permute.xlu0 %2323
        %2326 = vset.pattern.permute.xlu0 2
        %2327 = vperm.xlu0 %2326, %v1381
        %v2328 = vpop.permute.xlu0 %2327
        %2330 = vset.pattern.permute.xlu0 2
        %2331 = vperm.xlu0 %2330, %v1384
        %v2332 = vpop.permute.xlu0 %2331
        %2334 = vset.pattern.permute.xlu0 2
        %2335 = vperm.xlu0 %2334, %v1387
        %v2336 = vpop.permute.xlu0 %2335
        %2338 = vset.pattern.permute.xlu0 2
        %2339 = vperm.xlu0 %2338, %v1390
        %v2340 = vpop.permute.xlu0 %2339
        %2342 = vset.pattern.permute.xlu0 2
        %2343 = vperm.xlu0 %2342, %v1393
        %v2344 = vpop.permute.xlu0 %2343
        %2346 = vset.pattern.permute.xlu0 2
        %2347 = vperm.xlu0 %2346, %v1396
        %v2348 = vpop.permute.xlu0 %2347
        %2350 = vset.pattern.permute.xlu0 2
        %2351 = vperm.xlu0 %2350, %v1399
        %v2352 = vpop.permute.xlu0 %2351
        %2354 = vset.pattern.permute.xlu0 2
        %2355 = vperm.xlu0 %2354, %v1402
        %v2356 = vpop.permute.xlu0 %2355
        %2358 = vset.pattern.permute.xlu0 2
        %2359 = vperm.xlu0 %2358, %v1405
        %v2360 = vpop.permute.xlu0 %2359
        %v2362 = vmul.f32 %v2300, %v1635
        %v2363 = vmul.f32 %v2304, %v1638
        %v2364 = vmul.f32 %v2308, %v1641
        %v2365 = vmul.f32 %v2312, %v1644
        %v2366 = vmul.f32 %v2316, %v1647
        %v2367 = vmul.f32 %v2320, %v1650
        %v2368 = vmul.f32 %v2324, %v1653
        %v2369 = vmul.f32 %v2328, %v1656
        %v2370 = vmul.f32 %v2332, %v1659
        %v2371 = vmul.f32 %v2336, %v1662
        %v2372 = vmul.f32 %v2340, %v1665
        %v2373 = vmul.f32 %v2344, %v1668
        %v2374 = vmul.f32 %v2348, %v1671
        %v2375 = vmul.f32 %v2352, %v1674
        %v2376 = vmul.f32 %v2356, %v1677
        %v2377 = vmul.f32 %v2360, %v1680
        %v2378 = vadd.f32 %v2282, %v2362
        %v2379 = vadd.f32 %v2283, %v2363
        %v2380 = vadd.f32 %v2284, %v2364
        %v2381 = vadd.f32 %v2285, %v2365
        %v2382 = vadd.f32 %v2286, %v2366
        %v2383 = vadd.f32 %v2287, %v2367
        %v2384 = vadd.f32 %v2288, %v2368
        %v2385 = vadd.f32 %v2289, %v2369
        %v2386 = vadd.f32 %v2290, %v2370
        %v2387 = vadd.f32 %v2291, %v2371
        %v2388 = vadd.f32 %v2292, %v2372
        %v2389 = vadd.f32 %v2293, %v2373
        %v2390 = vadd.f32 %v2294, %v2374
        %v2391 = vadd.f32 %v2295, %v2375
        %v2392 = vadd.f32 %v2296, %v2376
        %v2393 = vadd.f32 %v2297, %v2377
        %2394 = vset.pattern.permute.xlu0 3
        %2395 = vperm.xlu0 %2394, %v1360
        %v2396 = vpop.permute.xlu0 %2395
        %2398 = vset.pattern.permute.xlu0 3
        %2399 = vperm.xlu0 %2398, %v1363
        %v2400 = vpop.permute.xlu0 %2399
        %2402 = vset.pattern.permute.xlu0 3
        %2403 = vperm.xlu0 %2402, %v1366
        %v2404 = vpop.permute.xlu0 %2403
        %2406 = vset.pattern.permute.xlu0 3
        %2407 = vperm.xlu0 %2406, %v1369
        %v2408 = vpop.permute.xlu0 %2407
        %2410 = vset.pattern.permute.xlu0 3
        %2411 = vperm.xlu0 %2410, %v1372
        %v2412 = vpop.permute.xlu0 %2411
        %2414 = vset.pattern.permute.xlu0 3
        %2415 = vperm.xlu0 %2414, %v1375
        %v2416 = vpop.permute.xlu0 %2415
        %2418 = vset.pattern.permute.xlu0 3
        %2419 = vperm.xlu0 %2418, %v1378
        %v2420 = vpop.permute.xlu0 %2419
        %2422 = vset.pattern.permute.xlu0 3
        %2423 = vperm.xlu0 %2422, %v1381
        %v2424 = vpop.permute.xlu0 %2423
        %2426 = vset.pattern.permute.xlu0 3
        %2427 = vperm.xlu0 %2426, %v1384
        %v2428 = vpop.permute.xlu0 %2427
        %2430 = vset.pattern.permute.xlu0 3
        %2431 = vperm.xlu0 %2430, %v1387
        %v2432 = vpop.permute.xlu0 %2431
        %2434 = vset.pattern.permute.xlu0 3
        %2435 = vperm.xlu0 %2434, %v1390
        %v2436 = vpop.permute.xlu0 %2435
        %2438 = vset.pattern.permute.xlu0 3
        %2439 = vperm.xlu0 %2438, %v1393
        %v2440 = vpop.permute.xlu0 %2439
        %2442 = vset.pattern.permute.xlu0 3
        %2443 = vperm.xlu0 %2442, %v1396
        %v2444 = vpop.permute.xlu0 %2443
        %2446 = vset.pattern.permute.xlu0 3
        %2447 = vperm.xlu0 %2446, %v1399
        %v2448 = vpop.permute.xlu0 %2447
        %2450 = vset.pattern.permute.xlu0 3
        %2451 = vperm.xlu0 %2450, %v1402
        %v2452 = vpop.permute.xlu0 %2451
        %2454 = vset.pattern.permute.xlu0 3
        %2455 = vperm.xlu0 %2454, %v1405
        %v2456 = vpop.permute.xlu0 %2455
        %v2458 = vmul.f32 %v2396, %v1700
        %v2459 = vmul.f32 %v2400, %v1703
        %v2460 = vmul.f32 %v2404, %v1706
        %v2461 = vmul.f32 %v2408, %v1709
        %v2462 = vmul.f32 %v2412, %v1712
        %v2463 = vmul.f32 %v2416, %v1715
        %v2464 = vmul.f32 %v2420, %v1718
        %v2465 = vmul.f32 %v2424, %v1721
        %v2466 = vmul.f32 %v2428, %v1724
        %v2467 = vmul.f32 %v2432, %v1727
        %v2468 = vmul.f32 %v2436, %v1730
        %v2469 = vmul.f32 %v2440, %v1733
        %v2470 = vmul.f32 %v2444, %v1736
        %v2471 = vmul.f32 %v2448, %v1739
        %v2472 = vmul.f32 %v2452, %v1742
        %v2473 = vmul.f32 %v2456, %v1745
        %v2474 = vadd.f32 %v2378, %v2458
        %v2475 = vadd.f32 %v2379, %v2459
        %v2476 = vadd.f32 %v2380, %v2460
        %v2477 = vadd.f32 %v2381, %v2461
        %v2478 = vadd.f32 %v2382, %v2462
        %v2479 = vadd.f32 %v2383, %v2463
        %v2480 = vadd.f32 %v2384, %v2464
        %v2481 = vadd.f32 %v2385, %v2465
        %v2482 = vadd.f32 %v2386, %v2466
        %v2483 = vadd.f32 %v2387, %v2467
        %v2484 = vadd.f32 %v2388, %v2468
        %v2485 = vadd.f32 %v2389, %v2469
        %v2486 = vadd.f32 %v2390, %v2470
        %v2487 = vadd.f32 %v2391, %v2471
        %v2488 = vadd.f32 %v2392, %v2472
        %v2489 = vadd.f32 %v2393, %v2473
        %2490 = vset.pattern.permute.xlu0 4
        %2491 = vperm.xlu0 %2490, %v1360
        %v2492 = vpop.permute.xlu0 %2491
        %2494 = vset.pattern.permute.xlu0 4
        %2495 = vperm.xlu0 %2494, %v1363
        %v2496 = vpop.permute.xlu0 %2495
        %2498 = vset.pattern.permute.xlu0 4
        %2499 = vperm.xlu0 %2498, %v1366
        %v2500 = vpop.permute.xlu0 %2499
        %2502 = vset.pattern.permute.xlu0 4
        %2503 = vperm.xlu0 %2502, %v1369
        %v2504 = vpop.permute.xlu0 %2503
        %2506 = vset.pattern.permute.xlu0 4
        %2507 = vperm.xlu0 %2506, %v1372
        %v2508 = vpop.permute.xlu0 %2507
        %2510 = vset.pattern.permute.xlu0 4
        %2511 = vperm.xlu0 %2510, %v1375
        %v2512 = vpop.permute.xlu0 %2511
        %2514 = vset.pattern.permute.xlu0 4
        %2515 = vperm.xlu0 %2514, %v1378
        %v2516 = vpop.permute.xlu0 %2515
        %2518 = vset.pattern.permute.xlu0 4
        %2519 = vperm.xlu0 %2518, %v1381
        %v2520 = vpop.permute.xlu0 %2519
        %2522 = vset.pattern.permute.xlu0 4
        %2523 = vperm.xlu0 %2522, %v1384
        %v2524 = vpop.permute.xlu0 %2523
        %2526 = vset.pattern.permute.xlu0 4
        %2527 = vperm.xlu0 %2526, %v1387
        %v2528 = vpop.permute.xlu0 %2527
        %2530 = vset.pattern.permute.xlu0 4
        %2531 = vperm.xlu0 %2530, %v1390
        %v2532 = vpop.permute.xlu0 %2531
        %2534 = vset.pattern.permute.xlu0 4
        %2535 = vperm.xlu0 %2534, %v1393
        %v2536 = vpop.permute.xlu0 %2535
        %2538 = vset.pattern.permute.xlu0 4
        %2539 = vperm.xlu0 %2538, %v1396
        %v2540 = vpop.permute.xlu0 %2539
        %2542 = vset.pattern.permute.xlu0 4
        %2543 = vperm.xlu0 %2542, %v1399
        %v2544 = vpop.permute.xlu0 %2543
        %2546 = vset.pattern.permute.xlu0 4
        %2547 = vperm.xlu0 %2546, %v1402
        %v2548 = vpop.permute.xlu0 %2547
        %2550 = vset.pattern.permute.xlu0 4
        %2551 = vperm.xlu0 %2550, %v1405
        %v2552 = vpop.permute.xlu0 %2551
        %v2554 = vmul.f32 %v2492, %v1765
        %v2555 = vmul.f32 %v2496, %v1768
        %v2556 = vmul.f32 %v2500, %v1771
        %v2557 = vmul.f32 %v2504, %v1774
        %v2558 = vmul.f32 %v2508, %v1777
        %v2559 = vmul.f32 %v2512, %v1780
        %v2560 = vmul.f32 %v2516, %v1783
        %v2561 = vmul.f32 %v2520, %v1786
        %v2562 = vmul.f32 %v2524, %v1789
        %v2563 = vmul.f32 %v2528, %v1792
        %v2564 = vmul.f32 %v2532, %v1795
        %v2565 = vmul.f32 %v2536, %v1798
        %v2566 = vmul.f32 %v2540, %v1801
        %v2567 = vmul.f32 %v2544, %v1804
        %v2568 = vmul.f32 %v2548, %v1807
        %v2569 = vmul.f32 %v2552, %v1810
        %v2570 = vadd.f32 %v2474, %v2554
        %v2571 = vadd.f32 %v2475, %v2555
        %v2572 = vadd.f32 %v2476, %v2556
        %v2573 = vadd.f32 %v2477, %v2557
        %v2574 = vadd.f32 %v2478, %v2558
        %v2575 = vadd.f32 %v2479, %v2559
        %v2576 = vadd.f32 %v2480, %v2560
        %v2577 = vadd.f32 %v2481, %v2561
        %v2578 = vadd.f32 %v2482, %v2562
        %v2579 = vadd.f32 %v2483, %v2563
        %v2580 = vadd.f32 %v2484, %v2564
        %v2581 = vadd.f32 %v2485, %v2565
        %v2582 = vadd.f32 %v2486, %v2566
        %v2583 = vadd.f32 %v2487, %v2567
        %v2584 = vadd.f32 %v2488, %v2568
        %v2585 = vadd.f32 %v2489, %v2569
        %2586 = vset.pattern.permute.xlu0 5
        %2587 = vperm.xlu0 %2586, %v1360
        %v2588 = vpop.permute.xlu0 %2587
        %2590 = vset.pattern.permute.xlu0 5
        %2591 = vperm.xlu0 %2590, %v1363
        %v2592 = vpop.permute.xlu0 %2591
        %2594 = vset.pattern.permute.xlu0 5
        %2595 = vperm.xlu0 %2594, %v1366
        %v2596 = vpop.permute.xlu0 %2595
        %2598 = vset.pattern.permute.xlu0 5
        %2599 = vperm.xlu0 %2598, %v1369
        %v2600 = vpop.permute.xlu0 %2599
        %2602 = vset.pattern.permute.xlu0 5
        %2603 = vperm.xlu0 %2602, %v1372
        %v2604 = vpop.permute.xlu0 %2603
        %2606 = vset.pattern.permute.xlu0 5
        %2607 = vperm.xlu0 %2606, %v1375
        %v2608 = vpop.permute.xlu0 %2607
        %2610 = vset.pattern.permute.xlu0 5
        %2611 = vperm.xlu0 %2610, %v1378
        %v2612 = vpop.permute.xlu0 %2611
        %2614 = vset.pattern.permute.xlu0 5
        %2615 = vperm.xlu0 %2614, %v1381
        %v2616 = vpop.permute.xlu0 %2615
        %2618 = vset.pattern.permute.xlu0 5
        %2619 = vperm.xlu0 %2618, %v1384
        %v2620 = vpop.permute.xlu0 %2619
        %2622 = vset.pattern.permute.xlu0 5
        %2623 = vperm.xlu0 %2622, %v1387
        %v2624 = vpop.permute.xlu0 %2623
        %2626 = vset.pattern.permute.xlu0 5
        %2627 = vperm.xlu0 %2626, %v1390
        %v2628 = vpop.permute.xlu0 %2627
        %2630 = vset.pattern.permute.xlu0 5
        %2631 = vperm.xlu0 %2630, %v1393
        %v2632 = vpop.permute.xlu0 %2631
        %2634 = vset.pattern.permute.xlu0 5
        %2635 = vperm.xlu0 %2634, %v1396
        %v2636 = vpop.permute.xlu0 %2635
        %2638 = vset.pattern.permute.xlu0 5
        %2639 = vperm.xlu0 %2638, %v1399
        %v2640 = vpop.permute.xlu0 %2639
        %2642 = vset.pattern.permute.xlu0 5
        %2643 = vperm.xlu0 %2642, %v1402
        %v2644 = vpop.permute.xlu0 %2643
        %2646 = vset.pattern.permute.xlu0 5
        %2647 = vperm.xlu0 %2646, %v1405
        %v2648 = vpop.permute.xlu0 %2647
        %v2650 = vmul.f32 %v2588, %v1830
        %v2651 = vmul.f32 %v2592, %v1833
        %v2652 = vmul.f32 %v2596, %v1836
        %v2653 = vmul.f32 %v2600, %v1839
        %v2654 = vmul.f32 %v2604, %v1842
        %v2655 = vmul.f32 %v2608, %v1845
        %v2656 = vmul.f32 %v2612, %v1848
        %v2657 = vmul.f32 %v2616, %v1851
        %v2658 = vmul.f32 %v2620, %v1854
        %v2659 = vmul.f32 %v2624, %v1857
        %v2660 = vmul.f32 %v2628, %v1860
        %v2661 = vmul.f32 %v2632, %v1863
        %v2662 = vmul.f32 %v2636, %v1866
        %v2663 = vmul.f32 %v2640, %v1869
        %v2664 = vmul.f32 %v2644, %v1872
        %v2665 = vmul.f32 %v2648, %v1875
        %v2666 = vadd.f32 %v2570, %v2650
        %v2667 = vadd.f32 %v2571, %v2651
        %v2668 = vadd.f32 %v2572, %v2652
        %v2669 = vadd.f32 %v2573, %v2653
        %v2670 = vadd.f32 %v2574, %v2654
        %v2671 = vadd.f32 %v2575, %v2655
        %v2672 = vadd.f32 %v2576, %v2656
        %v2673 = vadd.f32 %v2577, %v2657
        %v2674 = vadd.f32 %v2578, %v2658
        %v2675 = vadd.f32 %v2579, %v2659
        %v2676 = vadd.f32 %v2580, %v2660
        %v2677 = vadd.f32 %v2581, %v2661
        %v2678 = vadd.f32 %v2582, %v2662
        %v2679 = vadd.f32 %v2583, %v2663
        %v2680 = vadd.f32 %v2584, %v2664
        %v2681 = vadd.f32 %v2585, %v2665
        %2682 = vset.pattern.permute.xlu0 6
        %2683 = vperm.xlu0 %2682, %v1360
        %v2684 = vpop.permute.xlu0 %2683
        %2686 = vset.pattern.permute.xlu0 6
        %2687 = vperm.xlu0 %2686, %v1363
        %v2688 = vpop.permute.xlu0 %2687
        %2690 = vset.pattern.permute.xlu0 6
        %2691 = vperm.xlu0 %2690, %v1366
        %v2692 = vpop.permute.xlu0 %2691
        %2694 = vset.pattern.permute.xlu0 6
        %2695 = vperm.xlu0 %2694, %v1369
        %v2696 = vpop.permute.xlu0 %2695
        %2698 = vset.pattern.permute.xlu0 6
        %2699 = vperm.xlu0 %2698, %v1372
        %v2700 = vpop.permute.xlu0 %2699
        %2702 = vset.pattern.permute.xlu0 6
        %2703 = vperm.xlu0 %2702, %v1375
        %v2704 = vpop.permute.xlu0 %2703
        %2706 = vset.pattern.permute.xlu0 6
        %2707 = vperm.xlu0 %2706, %v1378
        %v2708 = vpop.permute.xlu0 %2707
        %2710 = vset.pattern.permute.xlu0 6
        %2711 = vperm.xlu0 %2710, %v1381
        %v2712 = vpop.permute.xlu0 %2711
        %2714 = vset.pattern.permute.xlu0 6
        %2715 = vperm.xlu0 %2714, %v1384
        %v2716 = vpop.permute.xlu0 %2715
        %2718 = vset.pattern.permute.xlu0 6
        %2719 = vperm.xlu0 %2718, %v1387
        %v2720 = vpop.permute.xlu0 %2719
        %2722 = vset.pattern.permute.xlu0 6
        %2723 = vperm.xlu0 %2722, %v1390
        %v2724 = vpop.permute.xlu0 %2723
        %2726 = vset.pattern.permute.xlu0 6
        %2727 = vperm.xlu0 %2726, %v1393
        %v2728 = vpop.permute.xlu0 %2727
        %2730 = vset.pattern.permute.xlu0 6
        %2731 = vperm.xlu0 %2730, %v1396
        %v2732 = vpop.permute.xlu0 %2731
        %2734 = vset.pattern.permute.xlu0 6
        %2735 = vperm.xlu0 %2734, %v1399
        %v2736 = vpop.permute.xlu0 %2735
        %2738 = vset.pattern.permute.xlu0 6
        %2739 = vperm.xlu0 %2738, %v1402
        %v2740 = vpop.permute.xlu0 %2739
        %2742 = vset.pattern.permute.xlu0 6
        %2743 = vperm.xlu0 %2742, %v1405
        %v2744 = vpop.permute.xlu0 %2743
        %v2746 = vmul.f32 %v2684, %v1895
        %v2747 = vmul.f32 %v2688, %v1898
        %v2748 = vmul.f32 %v2692, %v1901
        %v2749 = vmul.f32 %v2696, %v1904
        %v2750 = vmul.f32 %v2700, %v1907
        %v2751 = vmul.f32 %v2704, %v1910
        %v2752 = vmul.f32 %v2708, %v1913
        %v2753 = vmul.f32 %v2712, %v1916
        %v2754 = vmul.f32 %v2716, %v1919
        %v2755 = vmul.f32 %v2720, %v1922
        %v2756 = vmul.f32 %v2724, %v1925
        %v2757 = vmul.f32 %v2728, %v1928
        %v2758 = vmul.f32 %v2732, %v1931
        %v2759 = vmul.f32 %v2736, %v1934
        %v2760 = vmul.f32 %v2740, %v1937
        %v2761 = vmul.f32 %v2744, %v1940
        %v2762 = vadd.f32 %v2666, %v2746
        %v2763 = vadd.f32 %v2667, %v2747
        %v2764 = vadd.f32 %v2668, %v2748
        %v2765 = vadd.f32 %v2669, %v2749
        %v2766 = vadd.f32 %v2670, %v2750
        %v2767 = vadd.f32 %v2671, %v2751
        %v2768 = vadd.f32 %v2672, %v2752
        %v2769 = vadd.f32 %v2673, %v2753
        %v2770 = vadd.f32 %v2674, %v2754
        %v2771 = vadd.f32 %v2675, %v2755
        %v2772 = vadd.f32 %v2676, %v2756
        %v2773 = vadd.f32 %v2677, %v2757
        %v2774 = vadd.f32 %v2678, %v2758
        %v2775 = vadd.f32 %v2679, %v2759
        %v2776 = vadd.f32 %v2680, %v2760
        %v2777 = vadd.f32 %v2681, %v2761
        %2778 = vset.pattern.permute.xlu0 7
        %2779 = vperm.xlu0 %2778, %v1360
        %v2780 = vpop.permute.xlu0 %2779
        %2782 = vset.pattern.permute.xlu0 7
        %2783 = vperm.xlu0 %2782, %v1363
        %v2784 = vpop.permute.xlu0 %2783
        %2786 = vset.pattern.permute.xlu0 7
        %2787 = vperm.xlu0 %2786, %v1366
        %v2788 = vpop.permute.xlu0 %2787
        %2790 = vset.pattern.permute.xlu0 7
        %2791 = vperm.xlu0 %2790, %v1369
        %v2792 = vpop.permute.xlu0 %2791
        %2794 = vset.pattern.permute.xlu0 7
        %2795 = vperm.xlu0 %2794, %v1372
        %v2796 = vpop.permute.xlu0 %2795
        %2798 = vset.pattern.permute.xlu0 7
        %2799 = vperm.xlu0 %2798, %v1375
        %v2800 = vpop.permute.xlu0 %2799
        %2802 = vset.pattern.permute.xlu0 7
        %2803 = vperm.xlu0 %2802, %v1378
        %v2804 = vpop.permute.xlu0 %2803
        %2806 = vset.pattern.permute.xlu0 7
        %2807 = vperm.xlu0 %2806, %v1381
        %v2808 = vpop.permute.xlu0 %2807
        %2810 = vset.pattern.permute.xlu0 7
        %2811 = vperm.xlu0 %2810, %v1384
        %v2812 = vpop.permute.xlu0 %2811
        %2814 = vset.pattern.permute.xlu0 7
        %2815 = vperm.xlu0 %2814, %v1387
        %v2816 = vpop.permute.xlu0 %2815
        %2818 = vset.pattern.permute.xlu0 7
        %2819 = vperm.xlu0 %2818, %v1390
        %v2820 = vpop.permute.xlu0 %2819
        %2822 = vset.pattern.permute.xlu0 7
        %2823 = vperm.xlu0 %2822, %v1393
        %v2824 = vpop.permute.xlu0 %2823
        %2826 = vset.pattern.permute.xlu0 7
        %2827 = vperm.xlu0 %2826, %v1396
        %v2828 = vpop.permute.xlu0 %2827
        %2830 = vset.pattern.permute.xlu0 7
        %2831 = vperm.xlu0 %2830, %v1399
        %v2832 = vpop.permute.xlu0 %2831
        %2834 = vset.pattern.permute.xlu0 7
        %2835 = vperm.xlu0 %2834, %v1402
        %v2836 = vpop.permute.xlu0 %2835
        %2838 = vset.pattern.permute.xlu0 7
        %2839 = vperm.xlu0 %2838, %v1405
        %v2840 = vpop.permute.xlu0 %2839
        %v2842 = vmul.f32 %v2780, %v1960
        %v2843 = vmul.f32 %v2784, %v1963
        %v2844 = vmul.f32 %v2788, %v1966
        %v2845 = vmul.f32 %v2792, %v1969
        %v2846 = vmul.f32 %v2796, %v1972
        %v2847 = vmul.f32 %v2800, %v1975
        %v2848 = vmul.f32 %v2804, %v1978
        %v2849 = vmul.f32 %v2808, %v1981
        %v2850 = vmul.f32 %v2812, %v1984
        %v2851 = vmul.f32 %v2816, %v1987
        %v2852 = vmul.f32 %v2820, %v1990
        %v2853 = vmul.f32 %v2824, %v1993
        %v2854 = vmul.f32 %v2828, %v1996
        %v2855 = vmul.f32 %v2832, %v1999
        %v2856 = vmul.f32 %v2836, %v2002
        %v2857 = vmul.f32 %v2840, %v2005
        %v2858 = vadd.f32 %v2762, %v2842
        %v2859 = vadd.f32 %v2763, %v2843
        %v2860 = vadd.f32 %v2764, %v2844
        %v2861 = vadd.f32 %v2765, %v2845
        %v2862 = vadd.f32 %v2766, %v2846
        %v2863 = vadd.f32 %v2767, %v2847
        %v2864 = vadd.f32 %v2768, %v2848
        %v2865 = vadd.f32 %v2769, %v2849
        %v2866 = vadd.f32 %v2770, %v2850
        %v2867 = vadd.f32 %v2771, %v2851
        %v2868 = vadd.f32 %v2772, %v2852
        %v2869 = vadd.f32 %v2773, %v2853
        %v2870 = vadd.f32 %v2774, %v2854
        %v2871 = vadd.f32 %v2775, %v2855
        %v2872 = vadd.f32 %v2776, %v2856
        %v2873 = vadd.f32 %v2777, %v2857
        %2874 = vst [vmem:[%s423] sm:$0xff] %v2858
        %2875 = vst [vmem:[%s423 + $0x8] sm:$0xff] %v2859
        %2876 = vst [vmem:[%s423 + $0x10] sm:$0xff] %v2860
        %2877 = vst [vmem:[%s423 + $0x18] sm:$0xff] %v2861
        %2878 = vst [vmem:[%s423 + $0x20] sm:$0xff] %v2862
        %2879 = vst [vmem:[%s423 + $0x28] sm:$0xff] %v2863
        %2880 = vst [vmem:[%s423 + $0x30] sm:$0xff] %v2864
        %2881 = vst [vmem:[%s423 + $0x38] sm:$0xff] %v2865
        %2882 = vst [vmem:[%s423 + $0x40] sm:$0xff] %v2866
        %2883 = vst [vmem:[%s423 + $0x48] sm:$0xff] %v2867
        %2884 = vst [vmem:[%s423 + $0x50] sm:$0xff] %v2868
        %2885 = vst [vmem:[%s423 + $0x58] sm:$0xff] %v2869
        %2886 = vst [vmem:[%s423 + $0x60] sm:$0xff] %v2870
        %2887 = vst [vmem:[%s423 + $0x68] sm:$0xff] %v2871
        %2888 = vst [vmem:[%s423 + $0x70] sm:$0xff] %v2872
        %2889 = vst [vmem:[%s423 + $0x78] sm:$0xff] %v2873
        %s2890 = sand.u32 %s296, 1
        %s2891 = scalar_lea.sflag [#allocation3], %s2890
        %s2892 = sand.u32 %s296, 1
        %s2893 = smul.addr %s2892, 128
        %s2894 = scalar_lea.vmem [#allocation2], %s2893
        // Predicated region
        $region69: #{tpu_custom_call.1} parent=67 // pred_check
          %p2895 = pneg %p306
        $region70: #{tpu_custom_call.1} parent=67 // pred_check_branch
          %2897 = sbr.rel (%p2895) target = $region72
        $region71: #{tpu_custom_call.1} parent=67 // pred_region
          %s2898 = smul.u32 16, %s26
          %2900 = vsyncadd %s2891, 0
          %s2901 = smul.addr %s2898, 8
          %s2902 = scalar_lea.hbm %s12, %s2901
          %s2903 = sshll.u32 %s2894, 4
          %s2904 = int_to_ptr.vmem [resolvable:$true] %s2903
          %s2905 = sshll.u32 %s2902, 4
          %s2906 = int_to_ptr.hbm [resolvable:$true] %s2905
          %2911 = dma.vmem_to_hbm [thread:$0]  %s2904, 2048, %s2906, %s2891, 128, 128, 8
        $region72: #{tpu_custom_call.1} parent=67 // pred_fallthru
          _
      $region68: #{tpu_custom_call.1} parent=5 // pred_fallthru
        _
      %p2912 = scmp.le.s32.totalorder 2, %s21
      // Predicated region
      $region73: #{tpu_custom_call.1} parent=5 // pred_check
        %p2913 = pneg %p2912
      $region74: #{tpu_custom_call.1} parent=5 // pred_check_branch
        %2915 = sbr.rel (%p2913) target = $region76
      $region75: #{tpu_custom_call.1} parent=5 // pred_region
        %s2916 = ssub.s32 %s21, 2
        // Predicated region
        $region77: #{tpu_custom_call.1} parent=75 // pred_check
          %p2917 = pneg %p312
        $region78: #{tpu_custom_call.1} parent=75 // pred_check_branch
          %2919 = sbr.rel (%p2917) target = $region80
        $region79: #{tpu_custom_call.1} parent=75 // pred_region
          %s2920 = sand.u32 %s297, 1
          %s2921 = scalar_lea.sflag [#allocation3], %s2920
          %s2922 = sand.u32 %s297, 1
          %s2923 = smul.addr %s2922, 128
          %s2924 = scalar_lea.vmem [#allocation2], %s2923
          %2926 = dma.done %s2921, 2048
        $region80: #{tpu_custom_call.1} parent=75 // pred_fallthru
          _
      $region76: #{tpu_custom_call.1} parent=5 // pred_fallthru
        _
    $region6: #{tpu_custom_call.1} parent=1 // loop_footer
      %s25 = sadd.s32 1, %s21
    $region7: #{tpu_custom_call.1} parent=1 // loop_footer_branch
      %20 = sbr.rel target = $region3
    $region8: #{tpu_custom_call.1} parent=1 // loop_exit
      _
    %2927 = vsyncpa [#allocation3], 1
    %s2928 = scalar_lea.sflag [#allocation3], 1
    %2929 = vsyncpa %s2928, 1

</llo_original>
